<compile_context>
chip_gen: v7x
topology: tpu7x:2x2x1
jax: 0.10.0
libtpu: 0.0.40
codegen_flags: <defaults>
</compile_context>

<pallas_src>
import functools

import jax
import jax.numpy as jnp
from jax.experimental import pallas as pl
from jax.experimental.pallas import tpu as pltpu

HID = 256
NHEADS = 3
H3 = NHEADS * HID          # 768: fused hidden width
LANE = 128


# ---------------------------------------------------------------------------
# Kernel: one fused MLP over all three heads, weights resident in VMEM.
# ---------------------------------------------------------------------------
def dueling_q_kernel(obs_ref, act_ref, w1_ref, b1_ref, w2_ref, b2_ref,
                     w3_ref, b3_ref, q_ref, x_scr, *, obs_dim, act_dim):
    # Build the fused layer-1 input [obs | act | zero pad] in a VMEM scratch
    # (static slices; no wrapper-side concat/pad).
    x_scr[...] = jnp.zeros_like(x_scr)
    x_scr[:, 0:obs_dim] = obs_ref[...]
    x_scr[:, obs_dim:obs_dim + act_dim] = act_ref[...]

    # Layer 1 (f32, tiny K): (TB, Kpad) @ (Kpad, 768) -> (TB, 768)
    h1 = jnp.dot(x_scr[...], w1_ref[...],
                 preferred_element_type=jnp.float32) + b1_ref[...]
    h1 = jnp.maximum(h1, 0.0).astype(jnp.bfloat16)

    # Layer 2 (bf16, block-diagonal): (TB, 768) @ (768, 768) -> (TB, 768)
    h2 = jnp.dot(h1, w2_ref[...],
                 preferred_element_type=jnp.float32) + b2_ref[...]
    h2 = jnp.maximum(h2, 0.0)

    # Fused Linear(256,1) x 3: one 768-lane reduce (XLU) + pre-summed b3 (SMEM).
    q_ref[...] = jnp.sum(h2 * w3_ref[...], axis=-1, keepdims=True) + b3_ref[0]


# ---------------------------------------------------------------------------
# Parameter init (PyTorch nn.Linear default: U(-1/sqrt(fan_in), 1/sqrt(fan_in)))
# ---------------------------------------------------------------------------
def init_linear(key, fan_in, fan_out):
    kw, kb = jax.random.split(key)
    bound = 1.0 / float(fan_in) ** 0.5
    w = jax.random.uniform(kw, (fan_in, fan_out), jnp.float32, -bound, bound)
    b = jax.random.uniform(kb, (fan_out,), jnp.float32, -bound, bound)
    return w, b


def init_params(key, obs_dim, scan_dim, act_dim):
    in_dims = [obs_dim, scan_dim + act_dim, obs_dim - scan_dim + act_dim]  # v, ac, ag
    params = []
    for d_in in in_dims:
        k1, k2, k3, key = jax.random.split(key, 4)
        w1, b1 = init_linear(k1, d_in, HID)
        w2, b2 = init_linear(k2, HID, HID)
        w3, b3 = init_linear(k3, HID, 1)
        params.append(dict(w1=w1, b1=b1, w2=w2, b2=b2, w3=w3, b3=b3))
    return params


def prepare_params(params, obs_dim, scan_dim, act_dim):
    """One-time fuse/pad/cast of the three heads (NOT per forward call)."""
    goal_dim = obs_dim - scan_dim
    k = obs_dim + act_dim
    kpad = pl.cdiv(k, LANE) * LANE            # lane-aligned fused layer-1 K

    # Fused W1: rows laid out as [goal | scan | act | zero-pad], one 256-col
    # block per head.  Zero rows where a head does not consume that slab.
    w1 = jnp.zeros((kpad, H3), jnp.float32)
    # v head (cols   0:256): input = [goal, scan] == obs
    w1 = w1.at[0:obs_dim, 0:HID].set(params[0]["w1"])
    # ac head (cols 256:512): input = [scan, act]
    w1 = w1.at[goal_dim:obs_dim, HID:2 * HID].set(params[1]["w1"][0:scan_dim])
    w1 = w1.at[obs_dim:obs_dim + act_dim, HID:2 * HID].set(
        params[1]["w1"][scan_dim:scan_dim + act_dim])
    # ag head (cols 512:768): input = [goal, act]
    w1 = w1.at[0:goal_dim, 2 * HID:3 * HID].set(params[2]["w1"][0:goal_dim])
    w1 = w1.at[obs_dim:obs_dim + act_dim, 2 * HID:3 * HID].set(
        params[2]["w1"][goal_dim:goal_dim + act_dim])

    b1 = jnp.concatenate([params[h]["b1"] for h in range(NHEADS)]).reshape(1, H3)

    # Block-diagonal fused W2 (bulk weight -> bf16).
    w2 = jnp.zeros((H3, H3), jnp.float32)
    for h in range(NHEADS):
        w2 = w2.at[h * HID:(h + 1) * HID, h * HID:(h + 1) * HID].set(params[h]["w2"])
    w2 = w2.astype(jnp.bfloat16)

    b2 = jnp.concatenate([params[h]["b2"] for h in range(NHEADS)]).reshape(1, H3)
    w3 = jnp.concatenate([params[h]["w3"][:, 0] for h in range(NHEADS)]).reshape(1, H3)
    b3 = jnp.stack([params[h]["b3"][0] for h in range(NHEADS)]).sum().reshape(1)
    return dict(w1=w1, b1=b1, w2=w2, b2=b2, w3=w3, b3=b3.astype(jnp.float32))


# ---------------------------------------------------------------------------
# Forward wrapper: obs and act go straight into the kernel (no data munging).
# ---------------------------------------------------------------------------
@jax.jit
def dueling_q_forward(obs, act, packed):
    B, obs_dim = obs.shape
    act_dim = act.shape[1]
    kpad = packed["w1"].shape[0]

    # Batch tile: full batch when small; 512-row tiles (8-sublane aligned) when
    # large so activations/output pipeline while weights stay resident.
    TB = B if B <= 512 else 512
    grid = (pl.cdiv(B, TB),)

    kernel = functools.partial(dueling_q_kernel, obs_dim=obs_dim, act_dim=act_dim)

    flops = 2 * B * (kpad * H3 + H3 * H3) + 3 * B * H3
    bytes_accessed = (sum(int(v.size) * v.dtype.itemsize for v in packed.values())
                      + (int(obs.size) + int(act.size) + B) * 4)

    q = pl.pallas_call(
        kernel,
        out_shape=jax.ShapeDtypeStruct((B, 1), jnp.float32),
        grid=grid,
        in_specs=[
            pl.BlockSpec((TB, obs_dim), lambda i: (i, 0)),   # obs tile
            pl.BlockSpec((TB, act_dim), lambda i: (i, 0)),   # act tile
            pl.BlockSpec((kpad, H3), lambda i: (0, 0)),      # fused W1 (resident)
            pl.BlockSpec((1, H3), lambda i: (0, 0)),         # fused b1
            pl.BlockSpec((H3, H3), lambda i: (0, 0)),        # block-diag W2 (resident)
            pl.BlockSpec((1, H3), lambda i: (0, 0)),         # fused b2
            pl.BlockSpec((1, H3), lambda i: (0, 0)),         # fused w3
            pl.BlockSpec(memory_space=pltpu.MemorySpace.SMEM),  # sum(b3) scalar
        ],
        out_specs=pl.BlockSpec((TB, 1), lambda i: (i, 0)),
        scratch_shapes=[pltpu.VMEM((TB, kpad), jnp.float32)],
        compiler_params=pltpu.CompilerParams(
            dimension_semantics=("parallel",)),
        cost_estimate=pl.CostEstimate(flops=flops, transcendentals=0,
                                      bytes_accessed=bytes_accessed),
    )(obs, act, packed["w1"], packed["b1"], packed["w2"], packed["b2"],
      packed["w3"], packed["b3"])
    return q.reshape(B)                                      # free reshape, no slice


# ---------------------------------------------------------------------------
# Pure-JAX reference (f32, matches the PyTorch module semantics)
# ---------------------------------------------------------------------------
def dueling_q_reference(obs, act, params, obs_dim, scan_dim, act_dim):
    goal = obs[:, : obs_dim - scan_dim]
    scan = obs[:, obs_dim - scan_dim:]

    def mlp(x, p):
        h1 = jax.nn.relu(x @ p["w1"] + p["b1"])
        h2 = jax.nn.relu(h1 @ p["w2"] + p["b2"])
        return (h2 @ p["w3"] + p["b3"])[:, 0]

    v = mlp(jnp.concatenate([goal, scan], axis=-1), params[0])
    ac = mlp(jnp.concatenate([scan, act], axis=-1), params[1])
    ag = mlp(jnp.concatenate([goal, act], axis=-1), params[2])
    return v + ac + ag


if __name__ == "__main__":
    obs_dim, scan_dim, act_dim = 40, 24, 2
    B = 8

    key = jax.random.PRNGKey(0)
    k_obs, k_act, k_params = jax.random.split(key, 3)
    obs = jax.random.normal(k_obs, (B, obs_dim), jnp.float32)
    act = jax.random.uniform(k_act, (B, act_dim), jnp.float32, -1.0, 1.0)
    params = init_params(k_params, obs_dim, scan_dim, act_dim)
    packed = prepare_params(params, obs_dim, scan_dim, act_dim)   # one-time fuse/pack

    q = dueling_q_forward(obs, act, packed)
    q = jax.block_until_ready(q)

    q_ref = dueling_q_reference(obs, act, params, obs_dim, scan_dim, act_dim)
    assert q.shape == (B,)
    # Layer-2 weights/activations are bf16 (layer 1 is f32) -> loosened tolerance.
    assert jnp.allclose(q, q_ref, atol=2e-2, rtol=2e-2), (q, q_ref)
    print("KERNEL_OK")
</pallas_src>

<mosaic_0001>
module attributes {stable_mosaic.version = 11 : i64} {
  func.func @dueling_q_kernel(%arg0: i32, %arg1: memref<8x40xf32, #tpu.memory_space<vmem>>, %arg2: memref<8x2xf32, #tpu.memory_space<vmem>>, %arg3: memref<128x768xf32, #tpu.memory_space<vmem>>, %arg4: memref<1x768xf32, #tpu.memory_space<vmem>>, %arg5: memref<768x768xbf16, #tpu.memory_space<vmem>>, %arg6: memref<1x768xf32, #tpu.memory_space<vmem>>, %arg7: memref<1x768xf32, #tpu.memory_space<vmem>>, %arg8: memref<1xf32, #tpu.memory_space<smem>>, %arg9: memref<8x1xf32, #tpu.memory_space<vmem>>, %arg10: memref<8x128xf32, #tpu.memory_space<vmem>>) attributes {dimension_semantics = [#tpu.dimension_semantics<parallel>], iteration_bounds = array<i64: 1>, scalar_prefetch = 0 : i64, scratch_operands = 1 : i64, tpu.core_type = #tpu.core_type<tc>, window_params = [{transform_indices = @transform_0, window_bounds = array<i64: 8, 40>}, {transform_indices = @transform_1, window_bounds = array<i64: 8, 2>}, {pipeline_mode = #tpu.pipeline_mode<synchronous>, transform_indices = @transform_2, window_bounds = array<i64: 128, 768>}, {pipeline_mode = #tpu.pipeline_mode<synchronous>, transform_indices = @transform_3, window_bounds = array<i64: 1, 768>}, {pipeline_mode = #tpu.pipeline_mode<synchronous>, transform_indices = @transform_4, window_bounds = array<i64: 768, 768>}, {pipeline_mode = #tpu.pipeline_mode<synchronous>, transform_indices = @transform_5, window_bounds = array<i64: 1, 768>}, {pipeline_mode = #tpu.pipeline_mode<synchronous>, transform_indices = @transform_6, window_bounds = array<i64: 1, 768>}, {transform_indices = @transform_7, window_bounds = array<i64: 1>}, {transform_indices = @transform_8, window_bounds = array<i64: 8, 1>}]} {
    %cst = arith.constant 0.000000e+00 : f32
    %0 = vector.broadcast %cst : f32 to vector<8x128xf32>
    %c0 = arith.constant 0 : index
    %c0_0 = arith.constant 0 : index
    %1 = vector.load %arg10[%c0, %c0_0] : memref<8x128xf32, #tpu.memory_space<vmem>>, vector<8x128xf32>
    tpu.vector_store %arg10[%c0, %c0_0], %0 {strides = array<i32>} : memref<8x128xf32, #tpu.memory_space<vmem>>, vector<8x128xf32>,
    %c0_1 = arith.constant 0 : index
    %c0_2 = arith.constant 0 : index
    %2 = vector.load %arg1[%c0_1, %c0_2] : memref<8x40xf32, #tpu.memory_space<vmem>>, vector<8x40xf32>
    %c0_3 = arith.constant 0 : index
    %c0_4 = arith.constant 0 : index
    %3 = vector.load %arg10[%c0_3, %c0_4] : memref<8x128xf32, #tpu.memory_space<vmem>>, vector<8x40xf32>
    tpu.vector_store %arg10[%c0_3, %c0_4], %2 {strides = array<i32>} : memref<8x128xf32, #tpu.memory_space<vmem>>, vector<8x40xf32>,
    %c0_5 = arith.constant 0 : index
    %c0_6 = arith.constant 0 : index
    %4 = vector.load %arg2[%c0_5, %c0_6] : memref<8x2xf32, #tpu.memory_space<vmem>>, vector<8x2xf32>
    %c0_7 = arith.constant 0 : index
    %c40 = arith.constant 40 : index
    %5 = vector.load %arg10[%c0_7, %c40] : memref<8x128xf32, #tpu.memory_space<vmem>>, vector<8x2xf32>
    tpu.vector_store %arg10[%c0_7, %c40], %4 {strides = array<i32>} : memref<8x128xf32, #tpu.memory_space<vmem>>, vector<8x2xf32>,
    %c0_8 = arith.constant 0 : index
    %c0_9 = arith.constant 0 : index
    %6 = vector.load %arg10[%c0_8, %c0_9] : memref<8x128xf32, #tpu.memory_space<vmem>>, vector<8x128xf32>
    %c0_10 = arith.constant 0 : index
    %c0_11 = arith.constant 0 : index
    %7 = vector.load %arg3[%c0_10, %c0_11] : memref<128x768xf32, #tpu.memory_space<vmem>>, vector<128x768xf32>
    %cst_12 = arith.constant dense<0.000000e+00> : vector<8x768xf32>
    %8 = tpu.matmul %6, %7, %cst_12 {dimension_numbers = #tpu.dot_dimension_numbers<[1], [0], [0], [1], [0, 0, 1, 1], [], []>} : vector<8x128xf32>, vector<128x768xf32>, vector<8x768xf32> -> vector<8x768xf32>
    %c0_13 = arith.constant 0 : index
    %c0_14 = arith.constant 0 : index
    %9 = vector.load %arg4[%c0_13, %c0_14] : memref<1x768xf32, #tpu.memory_space<vmem>>, vector<1x768xf32>
    %10 = vector.broadcast %9 : vector<1x768xf32> to vector<8x768xf32>
    %11 = arith.addf %8, %10 : vector<8x768xf32>
    %cst_15 = arith.constant 0.000000e+00 : f32
    %12 = vector.broadcast %cst_15 : f32 to vector<8x768xf32>
    %13 = arith.maximumf %11, %12 : vector<8x768xf32>
    %14 = arith.truncf %13 : vector<8x768xf32> to vector<8x768xbf16>
    %c0_16 = arith.constant 0 : index
    %c0_17 = arith.constant 0 : index
    %15 = vector.load %arg5[%c0_16, %c0_17] : memref<768x768xbf16, #tpu.memory_space<vmem>>, vector<768x768xbf16>
    %cst_18 = arith.constant dense<0.000000e+00> : vector<8x768xf32>
    %16 = tpu.matmul %14, %15, %cst_18 {dimension_numbers = #tpu.dot_dimension_numbers<[1], [0], [0], [1], [0, 0, 1, 1], [], []>} : vector<8x768xbf16>, vector<768x768xbf16>, vector<8x768xf32> -> vector<8x768xf32>
    %c0_19 = arith.constant 0 : index
    %c0_20 = arith.constant 0 : index
    %17 = vector.load %arg6[%c0_19, %c0_20] : memref<1x768xf32, #tpu.memory_space<vmem>>, vector<1x768xf32>
    %18 = vector.broadcast %17 : vector<1x768xf32> to vector<8x768xf32>
    %19 = arith.addf %16, %18 : vector<8x768xf32>
    %cst_21 = arith.constant 0.000000e+00 : f32
    %20 = vector.broadcast %cst_21 : f32 to vector<8x768xf32>
    %21 = arith.maximumf %19, %20 : vector<8x768xf32>
    %c0_22 = arith.constant 0 : index
    %c0_23 = arith.constant 0 : index
    %22 = vector.load %arg7[%c0_22, %c0_23] : memref<1x768xf32, #tpu.memory_space<vmem>>, vector<1x768xf32>
    %23 = vector.broadcast %22 : vector<1x768xf32> to vector<8x768xf32>
    %24 = arith.mulf %21, %23 : vector<8x768xf32>
    %cst_24 = arith.constant dense<0.000000e+00> : vector<8xf32>
    %25 = vector.multi_reduction <add>, %24, %cst_24 [1] : vector<8x768xf32> to vector<8xf32>
    %26 = vector.shape_cast %25 : vector<8xf32> to vector<8x1xf32>
    %c0_25 = arith.constant 0 : index
    %27 = memref.load %arg8[%c0_25] : memref<1xf32, #tpu.memory_space<smem>>
    %28 = vector.broadcast %27 : f32 to vector<8x1xf32>
    %29 = arith.addf %26, %28 : vector<8x1xf32>
    %c0_26 = arith.constant 0 : index
    %c0_27 = arith.constant 0 : index
    %30 = vector.load %arg9[%c0_26, %c0_27] : memref<8x1xf32, #tpu.memory_space<vmem>>, vector<8x1xf32>
    tpu.vector_store %arg9[%c0_26, %c0_27], %29 {strides = array<i32>} : memref<8x1xf32, #tpu.memory_space<vmem>>, vector<8x1xf32>,
    return
  }
  func.func @transform_0(%arg0: i32) -> (i32, i32) {
    %c0_i32 = arith.constant 0 : i32
    %c0_i32_0 = arith.constant 0 : i32
    return %arg0, %c0_i32 : i32, i32
  }
  func.func @transform_1(%arg0: i32) -> (i32, i32) {
    %c0_i32 = arith.constant 0 : i32
    %c0_i32_0 = arith.constant 0 : i32
    return %arg0, %c0_i32 : i32, i32
  }
  func.func @transform_2(%arg0: i32) -> (i32, i32) {
    %c0_i32 = arith.constant 0 : i32
    %c0_i32_0 = arith.constant 0 : i32
    %c0_i32_1 = arith.constant 0 : i32
    return %c0_i32, %c0_i32_0 : i32, i32
  }
  func.func @transform_3(%arg0: i32) -> (i32, i32) {
    %c0_i32 = arith.constant 0 : i32
    %c0_i32_0 = arith.constant 0 : i32
    %c0_i32_1 = arith.constant 0 : i32
    return %c0_i32, %c0_i32_0 : i32, i32
  }
  func.func @transform_4(%arg0: i32) -> (i32, i32) {
    %c0_i32 = arith.constant 0 : i32
    %c0_i32_0 = arith.constant 0 : i32
    %c0_i32_1 = arith.constant 0 : i32
    return %c0_i32, %c0_i32_0 : i32, i32
  }
  func.func @transform_5(%arg0: i32) -> (i32, i32) {
    %c0_i32 = arith.constant 0 : i32
    %c0_i32_0 = arith.constant 0 : i32
    %c0_i32_1 = arith.constant 0 : i32
    return %c0_i32, %c0_i32_0 : i32, i32
  }
  func.func @transform_6(%arg0: i32) -> (i32, i32) {
    %c0_i32 = arith.constant 0 : i32
    %c0_i32_0 = arith.constant 0 : i32
    %c0_i32_1 = arith.constant 0 : i32
    return %c0_i32, %c0_i32_0 : i32, i32
  }
  func.func @transform_7(%arg0: i32) -> i32 {
    %c0_i32 = arith.constant 0 : i32
    %c0_i32_0 = arith.constant 0 : i32
    return %c0_i32 : i32
  }
  func.func @transform_8(%arg0: i32) -> (i32, i32) {
    %c0_i32 = arith.constant 0 : i32
    %c0_i32_0 = arith.constant 0 : i32
    return %arg0, %c0_i32 : i32, i32
  }
}

</mosaic_0001>

<llo_original>
// kernel: dueling_q_forward.1
$region0: #{dueling_q_forward.1}
  #allocation0 [shape = 'u32[]', space=smem, size = 0x4, offset = 0x4, fixed_abs, tag = 'smem constant byte address 0x4 - core index']
  #allocation1 [shape = 'u32[144,128]{1,0:T(1,128)}', space=vmem, size = 0x12000, scoped, tag = 'internal scratch']
  #allocation2 [shape = 'f32[8,128]{1,0:T(8,128)}', space=vmem, size = 0x1000, scoped, tag = 'scratch operand']
  #allocation3 [shape = 'f32[1]{0:T(128)S(6)}', space=smem, size = 0x200, scoped, tag = 'scoped memory for dueling_q_forward.1']
  %s0 = inlined_call_operand.hbm [shape: f32[8,40], index: 0, kind: input, shape index: {}]
  %s1 = inlined_call_operand.vmem [shape: f32[8,2], index: 1, kind: input, shape index: {}]
  %s2 = inlined_call_operand.hbm [shape: f32[128,768], index: 2, kind: input, shape index: {}]
  %s3 = inlined_call_operand.hbm [shape: f32[1,768], index: 3, kind: input, shape index: {}]
  %s4 = inlined_call_operand.hbm [shape: bf16[768,768], index: 4, kind: input, shape index: {}]
  %s5 = inlined_call_operand.hbm [shape: f32[1,768], index: 5, kind: input, shape index: {}]
  %s6 = inlined_call_operand.hbm [shape: f32[1,768], index: 6, kind: input, shape index: {}]
  %s7 = inlined_call_operand.<no memory space> [shape: f32[1], index: 7, kind: input, shape index: {}]
  %s8 = inlined_call_operand.vmem [shape: f32[8,1], index: 8, kind: output, shape index: {}]
  %s9 = sld [smem:[#allocation0]]
  $region66: #{dueling_q_forward.1} parent=0
    _
  %s11 = ssub.s32 1, %s9
  %s12 = scalar_select 0, %s11, %s9
  %13 = sst [smem:[#allocation3]] %s7
  $region1: #{dueling_q_forward.1} parent=0
    #allocation4 [shape = 'u8[4096]{0}', space=vmem, size = 0x1000, scoped, tag = 'input window, operand 0, single buffered']
    #allocation5 [shape = 's32[1]{0}', space=sflag, size = 0x4, scoped, tag = 'scoped memory for dueling_q_forward.1']
    #allocation6 [shape = 'u8[393216]{0}', space=vmem, size = 0x60000, scoped, tag = 'input window, operand 2, single buffered']
    #allocation7 [shape = 's32[1]{0}', space=sflag, size = 0x4, scoped, tag = 'scoped memory for dueling_q_forward.1']
    #allocation8 [shape = 'u8[3072]{0}', space=vmem, size = 0xc00, scoped, tag = 'input window, operand 3, single buffered']
    #allocation9 [shape = 'u8[1179648]{0}', space=vmem, size = 0x120000, scoped, tag = 'input window, operand 4, single buffered']
    #allocation10 [shape = 's32[1]{0}', space=sflag, size = 0x4, scoped, tag = 'scoped memory for dueling_q_forward.1']
    #allocation11 [shape = 'u8[3072]{0}', space=vmem, size = 0xc00, scoped, tag = 'input window, operand 5, single buffered']
    #allocation12 [shape = 'u8[3072]{0}', space=vmem, size = 0xc00, scoped, tag = 'input window, operand 6, single buffered']
    #allocation13 [shape = 's32[1]{0}', space=sflag, size = 0x4, scoped, tag = 'scoped memory for dueling_q_forward.1']
    %14 = vsyncpa [#allocation5], 0
    %15 = vsyncpa [#allocation7], 0
    %16 = vsyncpa [#allocation10], 0
    %17 = vsyncpa [#allocation13], 0
    // Predicated region
    $region2: #{dueling_q_forward.1} parent=1 // pred_check
      _
    $region3: #{dueling_q_forward.1} parent=1 // pred_check_branch
      %19 = sbr.rel (0) target = $region5
    $region4: #{dueling_q_forward.1} parent=1 // pred_region
      %s21 = ssub.s32 128, 128
      %22 = vsyncadd [#allocation5], %s21
      %s24 = sshll.u32 [#allocation4], 4
      %s25 = int_to_ptr.vmem [resolvable:$true] %s24
      %27 = dma.hbm_to_vmem [thread:$0]  %s0, 128, %s25, [#allocation5]
    $region5: #{dueling_q_forward.1} parent=1 // pred_fallthru
      _
    // Predicated region
    $region6: #{dueling_q_forward.1} parent=1 // pred_check
      _
    $region7: #{dueling_q_forward.1} parent=1 // pred_check_branch
      %29 = sbr.rel (0) target = $region9
    $region8: #{dueling_q_forward.1} parent=1 // pred_region
      _
    $region9: #{dueling_q_forward.1} parent=1 // pred_fallthru
      _
    // Predicated region
    $region10: #{dueling_q_forward.1} parent=1 // pred_check
      _
    $region11: #{dueling_q_forward.1} parent=1 // pred_check_branch
      %31 = sbr.rel (0) target = $region13
    $region12: #{dueling_q_forward.1} parent=1 // pred_region
      %s33 = ssub.s32 12288, 12288
      %34 = vsyncadd [#allocation7], %s33
      %s35 = sshll.u32 [#allocation6], 4
      %s36 = int_to_ptr.vmem [resolvable:$true] %s35
      %41 = dma.hbm_to_vmem [thread:$0]  %s2, 12288, %s36, [#allocation7], 768, 768, 48
    $region13: #{dueling_q_forward.1} parent=1 // pred_fallthru
      _
    // Predicated region
    $region14: #{dueling_q_forward.1} parent=1 // pred_check
      _
    $region15: #{dueling_q_forward.1} parent=1 // pred_check_branch
      %43 = sbr.rel (0) target = $region17
    $region16: #{dueling_q_forward.1} parent=1 // pred_region
      %s45 = ssub.s32 96, 96
      %46 = vsyncadd [#allocation7], %s45
      %s48 = sshll.u32 [#allocation8], 4
      %s49 = int_to_ptr.vmem [resolvable:$true] %s48
      %51 = dma.hbm_to_vmem [thread:$0]  %s3, 96, %s49, [#allocation7]
    $region17: #{dueling_q_forward.1} parent=1 // pred_fallthru
      _
    // Predicated region
    $region18: #{dueling_q_forward.1} parent=1 // pred_check
      _
    $region19: #{dueling_q_forward.1} parent=1 // pred_check_branch
      %53 = sbr.rel (0) target = $region21
    $region20: #{dueling_q_forward.1} parent=1 // pred_region
      %s55 = ssub.s32 36864, 36864
      %56 = vsyncadd [#allocation10], %s55
      %s57 = sshll.u32 [#allocation9], 4
      %s58 = int_to_ptr.vmem [resolvable:$true] %s57
      %63 = dma.hbm_to_vmem [thread:$0]  %s4, 36864, %s58, [#allocation10], 384, 384, 24
    $region21: #{dueling_q_forward.1} parent=1 // pred_fallthru
      _
    // Predicated region
    $region22: #{dueling_q_forward.1} parent=1 // pred_check
      _
    $region23: #{dueling_q_forward.1} parent=1 // pred_check_branch
      %65 = sbr.rel (0) target = $region25
    $region24: #{dueling_q_forward.1} parent=1 // pred_region
      %s67 = ssub.s32 96, 96
      %68 = vsyncadd [#allocation10], %s67
      %s70 = sshll.u32 [#allocation11], 4
      %s71 = int_to_ptr.vmem [resolvable:$true] %s70
      %73 = dma.hbm_to_vmem [thread:$0]  %s5, 96, %s71, [#allocation10]
    $region25: #{dueling_q_forward.1} parent=1 // pred_fallthru
      _
    // Predicated region
    $region26: #{dueling_q_forward.1} parent=1 // pred_check
      _
    $region27: #{dueling_q_forward.1} parent=1 // pred_check_branch
      %75 = sbr.rel (0) target = $region29
    $region28: #{dueling_q_forward.1} parent=1 // pred_region
      %s77 = ssub.s32 96, 96
      %78 = vsyncadd [#allocation13], %s77
      %s80 = sshll.u32 [#allocation12], 4
      %s81 = int_to_ptr.vmem [resolvable:$true] %s80
      %83 = dma.hbm_to_vmem [thread:$0]  %s6, 96, %s81, [#allocation13]
    $region29: #{dueling_q_forward.1} parent=1 // pred_fallthru
      _
    // Predicated region
    $region30: #{dueling_q_forward.1} parent=1 // pred_check
      _
    $region31: #{dueling_q_forward.1} parent=1 // pred_check_branch
      %85 = sbr.rel (0) target = $region33
    $region32: #{dueling_q_forward.1} parent=1 // pred_region
      _
    $region33: #{dueling_q_forward.1} parent=1 // pred_fallthru
      _
    // Predicated region
    $region34: #{dueling_q_forward.1} parent=1 // pred_check
      _
    $region35: #{dueling_q_forward.1} parent=1 // pred_check_branch
      %87 = sbr.rel (0) target = $region37
    $region36: #{dueling_q_forward.1} parent=1 // pred_region
      %88 = dma.done [#allocation5], 128
    $region37: #{dueling_q_forward.1} parent=1 // pred_fallthru
      _
    // Predicated region
    $region38: #{dueling_q_forward.1} parent=1 // pred_check
      _
    $region39: #{dueling_q_forward.1} parent=1 // pred_check_branch
      %90 = sbr.rel (0) target = $region41
    $region40: #{dueling_q_forward.1} parent=1 // pred_region
      %91 = dma.done [#allocation7], 12288
    $region41: #{dueling_q_forward.1} parent=1 // pred_fallthru
      _
    // Predicated region
    $region42: #{dueling_q_forward.1} parent=1 // pred_check
      _
    $region43: #{dueling_q_forward.1} parent=1 // pred_check_branch
      %93 = sbr.rel (0) target = $region45
    $region44: #{dueling_q_forward.1} parent=1 // pred_region
      %94 = dma.done [#allocation7], 96
    $region45: #{dueling_q_forward.1} parent=1 // pred_fallthru
      _
    // Predicated region
    $region46: #{dueling_q_forward.1} parent=1 // pred_check
      _
    $region47: #{dueling_q_forward.1} parent=1 // pred_check_branch
      %96 = sbr.rel (0) target = $region49
    $region48: #{dueling_q_forward.1} parent=1 // pred_region
      %97 = dma.done [#allocation10], 36864
    $region49: #{dueling_q_forward.1} parent=1 // pred_fallthru
      _
    // Predicated region
    $region50: #{dueling_q_forward.1} parent=1 // pred_check
      _
    $region51: #{dueling_q_forward.1} parent=1 // pred_check_branch
      %99 = sbr.rel (0) target = $region53
    $region52: #{dueling_q_forward.1} parent=1 // pred_region
      %100 = dma.done [#allocation10], 96
    $region53: #{dueling_q_forward.1} parent=1 // pred_fallthru
      _
    // Predicated region
    $region54: #{dueling_q_forward.1} parent=1 // pred_check
      _
    $region55: #{dueling_q_forward.1} parent=1 // pred_check_branch
      %102 = sbr.rel (0) target = $region57
    $region56: #{dueling_q_forward.1} parent=1 // pred_region
      %103 = dma.done [#allocation13], 96
    $region57: #{dueling_q_forward.1} parent=1 // pred_fallthru
      _
    %104 = vst [vmem:[#allocation2] sm:$0xff] 0.0
    %v105 = vld [vmem:[#allocation4] sm:$0xff]
    %vm106 = vcmask 326656
    %107 = vst.msk [vmem:[#allocation2] sm:$0xff] %vm106, %v105
    %v108 = vld [vmem:[%s1] sm:$0xff]
    %110 = vrot.lane.b32.xlu0 %v108, 40
    %v111 = vpop.permute.xlu0 %110
    %vm113 = vcmask 343360
    %114 = vst.msk [vmem:[#allocation2] sm:$0xff] %vm113, %v111
    %v115 = vld [vmem:[#allocation2] sm:$0xff]
    %v116 = vld [vmem:[#allocation6] sm:$0xff]
    %v117 = vld [vmem:[#allocation6 + $0x8] sm:$0xff]
    %v118 = vld [vmem:[#allocation6 + $0x10] sm:$0xff]
    %v119 = vld [vmem:[#allocation6 + $0x18] sm:$0xff]
    %v120 = vld [vmem:[#allocation6 + $0x20] sm:$0xff]
    %v121 = vld [vmem:[#allocation6 + $0x28] sm:$0xff]
    %v122 = vld [vmem:[#allocation6 + $0x30] sm:$0xff]
    %v123 = vld [vmem:[#allocation6 + $0x38] sm:$0xff]
    %v124 = vld [vmem:[#allocation6 + $0x40] sm:$0xff]
    %v125 = vld [vmem:[#allocation6 + $0x48] sm:$0xff]
    %v126 = vld [vmem:[#allocation6 + $0x50] sm:$0xff]
    %v127 = vld [vmem:[#allocation6 + $0x58] sm:$0xff]
    %v128 = vld [vmem:[#allocation6 + $0x60] sm:$0xff]
    %v129 = vld [vmem:[#allocation6 + $0x68] sm:$0xff]
    %v130 = vld [vmem:[#allocation6 + $0x70] sm:$0xff]
    %v131 = vld [vmem:[#allocation6 + $0x78] sm:$0xff]
    %v132 = vld [vmem:[#allocation6 + $0x80] sm:$0xff]
    %v133 = vld [vmem:[#allocation6 + $0x88] sm:$0xff]
    %v134 = vld [vmem:[#allocation6 + $0x90] sm:$0xff]
    %v135 = vld [vmem:[#allocation6 + $0x98] sm:$0xff]
    %v136 = vld [vmem:[#allocation6 + $0xa0] sm:$0xff]
    %v137 = vld [vmem:[#allocation6 + $0xa8] sm:$0xff]
    %v138 = vld [vmem:[#allocation6 + $0xb0] sm:$0xff]
    %v139 = vld [vmem:[#allocation6 + $0xb8] sm:$0xff]
    %v140 = vld [vmem:[#allocation6 + $0xc0] sm:$0xff]
    %v141 = vld [vmem:[#allocation6 + $0xc8] sm:$0xff]
    %v142 = vld [vmem:[#allocation6 + $0xd0] sm:$0xff]
    %v143 = vld [vmem:[#allocation6 + $0xd8] sm:$0xff]
    %v144 = vld [vmem:[#allocation6 + $0xe0] sm:$0xff]
    %v145 = vld [vmem:[#allocation6 + $0xe8] sm:$0xff]
    %v146 = vld [vmem:[#allocation6 + $0xf0] sm:$0xff]
    %v147 = vld [vmem:[#allocation6 + $0xf8] sm:$0xff]
    %v148 = vld [vmem:[#allocation6 + $0x100] sm:$0xff]
    %v149 = vld [vmem:[#allocation6 + $0x108] sm:$0xff]
    %v150 = vld [vmem:[#allocation6 + $0x110] sm:$0xff]
    %v151 = vld [vmem:[#allocation6 + $0x118] sm:$0xff]
    %v152 = vld [vmem:[#allocation6 + $0x120] sm:$0xff]
    %v153 = vld [vmem:[#allocation6 + $0x128] sm:$0xff]
    %v154 = vld [vmem:[#allocation6 + $0x130] sm:$0xff]
    %v155 = vld [vmem:[#allocation6 + $0x138] sm:$0xff]
    %v156 = vld [vmem:[#allocation6 + $0x140] sm:$0xff]
    %v157 = vld [vmem:[#allocation6 + $0x148] sm:$0xff]
    %v158 = vld [vmem:[#allocation6 + $0x150] sm:$0xff]
    %v159 = vld [vmem:[#allocation6 + $0x158] sm:$0xff]
    %v160 = vld [vmem:[#allocation6 + $0x160] sm:$0xff]
    %v161 = vld [vmem:[#allocation6 + $0x168] sm:$0xff]
    %v162 = vld [vmem:[#allocation6 + $0x170] sm:$0xff]
    %v163 = vld [vmem:[#allocation6 + $0x178] sm:$0xff]
    %v164 = vld [vmem:[#allocation6 + $0x180] sm:$0xff]
    %v165 = vld [vmem:[#allocation6 + $0x188] sm:$0xff]
    %v166 = vld [vmem:[#allocation6 + $0x190] sm:$0xff]
    %v167 = vld [vmem:[#allocation6 + $0x198] sm:$0xff]
    %v168 = vld [vmem:[#allocation6 + $0x1a0] sm:$0xff]
    %v169 = vld [vmem:[#allocation6 + $0x1a8] sm:$0xff]
    %v170 = vld [vmem:[#allocation6 + $0x1b0] sm:$0xff]
    %v171 = vld [vmem:[#allocation6 + $0x1b8] sm:$0xff]
    %v172 = vld [vmem:[#allocation6 + $0x1c0] sm:$0xff]
    %v173 = vld [vmem:[#allocation6 + $0x1c8] sm:$0xff]
    %v174 = vld [vmem:[#allocation6 + $0x1d0] sm:$0xff]
    %v175 = vld [vmem:[#allocation6 + $0x1d8] sm:$0xff]
    %v176 = vld [vmem:[#allocation6 + $0x1e0] sm:$0xff]
    %v177 = vld [vmem:[#allocation6 + $0x1e8] sm:$0xff]
    %v178 = vld [vmem:[#allocation6 + $0x1f0] sm:$0xff]
    %v179 = vld [vmem:[#allocation6 + $0x1f8] sm:$0xff]
    %v180 = vld [vmem:[#allocation6 + $0x200] sm:$0xff]
    %v181 = vld [vmem:[#allocation6 + $0x208] sm:$0xff]
    %v182 = vld [vmem:[#allocation6 + $0x210] sm:$0xff]
    %v183 = vld [vmem:[#allocation6 + $0x218] sm:$0xff]
    %v184 = vld [vmem:[#allocation6 + $0x220] sm:$0xff]
    %v185 = vld [vmem:[#allocation6 + $0x228] sm:$0xff]
    %v186 = vld [vmem:[#allocation6 + $0x230] sm:$0xff]
    %v187 = vld [vmem:[#allocation6 + $0x238] sm:$0xff]
    %v188 = vld [vmem:[#allocation6 + $0x240] sm:$0xff]
    %v189 = vld [vmem:[#allocation6 + $0x248] sm:$0xff]
    %v190 = vld [vmem:[#allocation6 + $0x250] sm:$0xff]
    %v191 = vld [vmem:[#allocation6 + $0x258] sm:$0xff]
    %v192 = vld [vmem:[#allocation6 + $0x260] sm:$0xff]
    %v193 = vld [vmem:[#allocation6 + $0x268] sm:$0xff]
    %v194 = vld [vmem:[#allocation6 + $0x270] sm:$0xff]
    %v195 = vld [vmem:[#allocation6 + $0x278] sm:$0xff]
    %v196 = vld [vmem:[#allocation6 + $0x280] sm:$0xff]
    %v197 = vld [vmem:[#allocation6 + $0x288] sm:$0xff]
    %v198 = vld [vmem:[#allocation6 + $0x290] sm:$0xff]
    %v199 = vld [vmem:[#allocation6 + $0x298] sm:$0xff]
    %v200 = vld [vmem:[#allocation6 + $0x2a0] sm:$0xff]
    %v201 = vld [vmem:[#allocation6 + $0x2a8] sm:$0xff]
    %v202 = vld [vmem:[#allocation6 + $0x2b0] sm:$0xff]
    %v203 = vld [vmem:[#allocation6 + $0x2b8] sm:$0xff]
    %v204 = vld [vmem:[#allocation6 + $0x2c0] sm:$0xff]
    %v205 = vld [vmem:[#allocation6 + $0x2c8] sm:$0xff]
    %v206 = vld [vmem:[#allocation6 + $0x2d0] sm:$0xff]
    %v207 = vld [vmem:[#allocation6 + $0x2d8] sm:$0xff]
    %v208 = vld [vmem:[#allocation6 + $0x2e0] sm:$0xff]
    %v209 = vld [vmem:[#allocation6 + $0x2e8] sm:$0xff]
    %v210 = vld [vmem:[#allocation6 + $0x2f0] sm:$0xff]
    %v211 = vld [vmem:[#allocation6 + $0x2f8] sm:$0xff]
    %v212 = vld [vmem:[#allocation8] sm:$0x3f]
    %v214 = vlaneseq
    %v215 = vshrl.u32 %v214, 7
    %v216 = vsub.s32 0, %v215
    %v217 = vrot.slane %v212, %v216
    %v218 = vlaneseq
    %v219 = vshrl.u32 %v218, 7
    %v220 = vsub.s32 1, %v219
    %v221 = vrot.slane %v212, %v220
    %v222 = vlaneseq
    %v223 = vshrl.u32 %v222, 7
    %v224 = vsub.s32 2, %v223
    %v225 = vrot.slane %v212, %v224
    %v226 = vlaneseq
    %v227 = vshrl.u32 %v226, 7
    %v228 = vsub.s32 3, %v227
    %v229 = vrot.slane %v212, %v228
    %v230 = vlaneseq
    %v231 = vshrl.u32 %v230, 7
    %v232 = vsub.s32 4, %v231
    %v233 = vrot.slane %v212, %v232
    %v234 = vlaneseq
    %v235 = vshrl.u32 %v234, 7
    %v236 = vsub.s32 5, %v235
    %v237 = vrot.slane %v212, %v236
    %244 = vmatprep.subr.mxu0 %v117
    %245 = vmatpush1.msra.mxu0 %v116
    %246 = vmatprep.subr.mxu0 %v123
    %247 = vmatpush1.msra.mxu0 %v122
    %248 = vmatprep.subr.mxu0 %v129
    %249 = vmatpush1.msra.mxu0 %v128
    %250 = vmatprep.subr.mxu0 %v135
    %251 = vmatpush1.msra.mxu0 %v134
    %252 = vmatprep.subr.mxu0 %v141
    %253 = vmatpush1.msra.mxu0 %v140
    %254 = vmatprep.subr.mxu0 %v147
    %255 = vmatpush1.msra.mxu0 %v146
    %256 = vmatprep.subr.mxu0 %v153
    %257 = vmatpush1.msra.mxu0 %v152
    %258 = vmatprep.subr.mxu0 %v159
    %259 = vmatpush1.msra.mxu0 %v158
    %260 = vmatprep.subr.mxu0 %v165
    %261 = vmatpush1.msra.mxu0 %v164
    %262 = vmatprep.subr.mxu0 %v171
    %263 = vmatpush1.msra.mxu0 %v170
    %264 = vmatprep.subr.mxu0 %v177
    %265 = vmatpush1.msra.mxu0 %v176
    %266 = vmatprep.subr.mxu0 %v183
    %267 = vmatpush1.msra.mxu0 %v182
    %268 = vmatprep.subr.mxu0 %v189
    %269 = vmatpush1.msra.mxu0 %v188
    %270 = vmatprep.subr.mxu0 %v195
    %271 = vmatpush1.msra.mxu0 %v194
    %272 = vmatprep.subr.mxu0 %v201
    %273 = vmatpush1.msra.mxu0 %v200
    %274 = vmatprep.subr.mxu0 %v207
    %275 = vmatpush1.msra.mxu0 %v206
    %276 = vmatprep.subr.mxu0 0.0
    %277 = vmatpush1.msra.mxu0 0.0
    %278 = vmatprep.subr.mxu0 0.0
    %279 = vmatpush1.msra.mxu0 0.0
    %280 = vmatprep.subr.mxu0 0.0
    %281 = vmatpush1.msra.mxu0 0.0
    %282 = vmatprep.subr.mxu0 0.0
    %283 = vmatpush1.msra.mxu0 0.0
    %284 = vmatprep.subr.mxu0 0.0
    %285 = vmatpush1.msra.mxu0 0.0
    %286 = vmatprep.subr.mxu0 0.0
    %287 = vmatpush1.msra.mxu0 0.0
    %288 = vmatprep.subr.mxu0 0.0
    %289 = vmatpush1.msra.mxu0 0.0
    %290 = vmatprep.subr.mxu0 0.0
    %291 = vmatpush1.msra.mxu0 0.0
    %292 = vmatprep.subr.mxu0 0.0
    %293 = vmatpush1.msra.mxu0 0.0
    %294 = vmatprep.subr.mxu0 0.0
    %295 = vmatpush1.msra.mxu0 0.0
    %296 = vmatprep.subr.mxu0 0.0
    %297 = vmatpush1.msra.mxu0 0.0
    %298 = vmatprep.subr.mxu0 0.0
    %299 = vmatpush1.msra.mxu0 0.0
    %300 = vmatprep.subr.mxu0 0.0
    %301 = vmatpush1.msra.mxu0 0.0
    %302 = vmatprep.subr.mxu0 0.0
    %303 = vmatpush1.msra.mxu0 0.0
    %304 = vmatprep.subr.mxu0 0.0
    %305 = vmatpush1.msra.mxu0 0.0
    %306 = vmatprep.subr.mxu0 0.0
    %307 = vmatpush1.msra.mxu0 0.0
    %308 = vmatprep.mubr.f32.mxu0 0.0
    %309 = vmatmul.mubr.f32.gmra.mrb[0].mxu0 %v115
    %v310 = vpop.f32.mrb[0].mxu0
    %v311 = vadd.f32 %v217, %v310
    %v312 = vpop.f32.mrb[0].mxu0
    %v313 = vadd.f32 %v221, %v312
    %314 = vdwg.mxu0
    %315 = vmatprep.subr.mxu0 %v119
    %316 = vmatpush1.msra.mxu0 %v118
    %317 = vmatprep.subr.mxu0 %v125
    %318 = vmatpush1.msra.mxu0 %v124
    %319 = vmatprep.subr.mxu0 %v131
    %320 = vmatpush1.msra.mxu0 %v130
    %321 = vmatprep.subr.mxu0 %v137
    %322 = vmatpush1.msra.mxu0 %v136
    %323 = vmatprep.subr.mxu0 %v143
    %324 = vmatpush1.msra.mxu0 %v142
    %325 = vmatprep.subr.mxu0 %v149
    %326 = vmatpush1.msra.mxu0 %v148
    %327 = vmatprep.subr.mxu0 %v155
    %328 = vmatpush1.msra.mxu0 %v154
    %329 = vmatprep.subr.mxu0 %v161
    %330 = vmatpush1.msra.mxu0 %v160
    %331 = vmatprep.subr.mxu0 %v167
    %332 = vmatpush1.msra.mxu0 %v166
    %333 = vmatprep.subr.mxu0 %v173
    %334 = vmatpush1.msra.mxu0 %v172
    %335 = vmatprep.subr.mxu0 %v179
    %336 = vmatpush1.msra.mxu0 %v178
    %337 = vmatprep.subr.mxu0 %v185
    %338 = vmatpush1.msra.mxu0 %v184
    %339 = vmatprep.subr.mxu0 %v191
    %340 = vmatpush1.msra.mxu0 %v190
    %341 = vmatprep.subr.mxu0 %v197
    %342 = vmatpush1.msra.mxu0 %v196
    %343 = vmatprep.subr.mxu0 %v203
    %344 = vmatpush1.msra.mxu0 %v202
    %345 = vmatprep.subr.mxu0 %v209
    %346 = vmatpush1.msra.mxu0 %v208
    %347 = vmatprep.subr.mxu0 0.0
    %348 = vmatpush1.msra.mxu0 0.0
    %349 = vmatprep.subr.mxu0 0.0
    %350 = vmatpush1.msra.mxu0 0.0
    %351 = vmatprep.subr.mxu0 0.0
    %352 = vmatpush1.msra.mxu0 0.0
    %353 = vmatprep.subr.mxu0 0.0
    %354 = vmatpush1.msra.mxu0 0.0
    %355 = vmatprep.subr.mxu0 0.0
    %356 = vmatpush1.msra.mxu0 0.0
    %357 = vmatprep.subr.mxu0 0.0
    %358 = vmatpush1.msra.mxu0 0.0
    %359 = vmatprep.subr.mxu0 0.0
    %360 = vmatpush1.msra.mxu0 0.0
    %361 = vmatprep.subr.mxu0 0.0
    %362 = vmatpush1.msra.mxu0 0.0
    %363 = vmatprep.subr.mxu0 0.0
    %364 = vmatpush1.msra.mxu0 0.0
    %365 = vmatprep.subr.mxu0 0.0
    %366 = vmatpush1.msra.mxu0 0.0
    %367 = vmatprep.subr.mxu0 0.0
    %368 = vmatpush1.msra.mxu0 0.0
    %369 = vmatprep.subr.mxu0 0.0
    %370 = vmatpush1.msra.mxu0 0.0
    %371 = vmatprep.subr.mxu0 0.0
    %372 = vmatpush1.msra.mxu0 0.0
    %373 = vmatprep.subr.mxu0 0.0
    %374 = vmatpush1.msra.mxu0 0.0
    %375 = vmatprep.subr.mxu0 0.0
    %376 = vmatpush1.msra.mxu0 0.0
    %377 = vmatprep.subr.mxu0 0.0
    %378 = vmatpush1.msra.mxu0 0.0
    %379 = vmatprep.mubr.f32.mxu0 0.0
    %380 = vmatmul.mubr.f32.gmra.mrb[0].mxu0 %v115
    %v381 = vpop.f32.mrb[0].mxu0
    %v382 = vadd.f32 %v225, %v381
    %v383 = vpop.f32.mrb[0].mxu0
    %v384 = vadd.f32 %v229, %v383
    %385 = vdwg.mxu0
    %386 = vmatprep.subr.mxu0 %v121
    %387 = vmatpush1.msra.mxu0 %v120
    %388 = vmatprep.subr.mxu0 %v127
    %389 = vmatpush1.msra.mxu0 %v126
    %390 = vmatprep.subr.mxu0 %v133
    %391 = vmatpush1.msra.mxu0 %v132
    %392 = vmatprep.subr.mxu0 %v139
    %393 = vmatpush1.msra.mxu0 %v138
    %394 = vmatprep.subr.mxu0 %v145
    %395 = vmatpush1.msra.mxu0 %v144
    %396 = vmatprep.subr.mxu0 %v151
    %397 = vmatpush1.msra.mxu0 %v150
    %398 = vmatprep.subr.mxu0 %v157
    %399 = vmatpush1.msra.mxu0 %v156
    %400 = vmatprep.subr.mxu0 %v163
    %401 = vmatpush1.msra.mxu0 %v162
    %402 = vmatprep.subr.mxu0 %v169
    %403 = vmatpush1.msra.mxu0 %v168
    %404 = vmatprep.subr.mxu0 %v175
    %405 = vmatpush1.msra.mxu0 %v174
    %406 = vmatprep.subr.mxu0 %v181
    %407 = vmatpush1.msra.mxu0 %v180
    %408 = vmatprep.subr.mxu0 %v187
    %409 = vmatpush1.msra.mxu0 %v186
    %410 = vmatprep.subr.mxu0 %v193
    %411 = vmatpush1.msra.mxu0 %v192
    %412 = vmatprep.subr.mxu0 %v199
    %413 = vmatpush1.msra.mxu0 %v198
    %414 = vmatprep.subr.mxu0 %v205
    %415 = vmatpush1.msra.mxu0 %v204
    %416 = vmatprep.subr.mxu0 %v211
    %417 = vmatpush1.msra.mxu0 %v210
    %418 = vmatprep.subr.mxu0 0.0
    %419 = vmatpush1.msra.mxu0 0.0
    %420 = vmatprep.subr.mxu0 0.0
    %421 = vmatpush1.msra.mxu0 0.0
    %422 = vmatprep.subr.mxu0 0.0
    %423 = vmatpush1.msra.mxu0 0.0
    %424 = vmatprep.subr.mxu0 0.0
    %425 = vmatpush1.msra.mxu0 0.0
    %426 = vmatprep.subr.mxu0 0.0
    %427 = vmatpush1.msra.mxu0 0.0
    %428 = vmatprep.subr.mxu0 0.0
    %429 = vmatpush1.msra.mxu0 0.0
    %430 = vmatprep.subr.mxu0 0.0
    %431 = vmatpush1.msra.mxu0 0.0
    %432 = vmatprep.subr.mxu0 0.0
    %433 = vmatpush1.msra.mxu0 0.0
    %434 = vmatprep.subr.mxu0 0.0
    %435 = vmatpush1.msra.mxu0 0.0
    %436 = vmatprep.subr.mxu0 0.0
    %437 = vmatpush1.msra.mxu0 0.0
    %438 = vmatprep.subr.mxu0 0.0
    %439 = vmatpush1.msra.mxu0 0.0
    %440 = vmatprep.subr.mxu0 0.0
    %441 = vmatpush1.msra.mxu0 0.0
    %442 = vmatprep.subr.mxu0 0.0
    %443 = vmatpush1.msra.mxu0 0.0
    %444 = vmatprep.subr.mxu0 0.0
    %445 = vmatpush1.msra.mxu0 0.0
    %446 = vmatprep.subr.mxu0 0.0
    %447 = vmatpush1.msra.mxu0 0.0
    %448 = vmatprep.subr.mxu0 0.0
    %449 = vmatpush1.msra.mxu0 0.0
    %450 = vmatprep.mubr.f32.mxu0 0.0
    %451 = vmatmul.mubr.f32.gmra.mrb[0].mxu0 %v115
    %v452 = vpop.f32.mrb[0].mxu0
    %v453 = vadd.f32 %v233, %v452
    %v454 = vpop.f32.mrb[0].mxu0
    %v455 = vadd.f32 %v237, %v454
    %456 = vdwg.mxu0
    %v457 = vmax.f32 %v311, 0.0
    %v458 = vmax.f32 %v313, 0.0
    %v459 = vmax.f32 %v382, 0.0
    %v460 = vmax.f32 %v384, 0.0
    %v461 = vmax.f32 %v453, 0.0
    %v462 = vmax.f32 %v455, 0.0
    %v463 = vpack.c.bf16 %v457, %v457
    %v464 = vpack.c.bf16 %v458, %v458
    %v465 = vpack.c.bf16 %v459, %v459
    %v466 = vpack.c.bf16 %v460, %v460
    %v467 = vpack.c.bf16 %v461, %v461
    %v468 = vpack.c.bf16 %v462, %v462
    %v469 = vld [vmem:[#allocation9] sm:$0xff]
    %v470 = vld [vmem:[#allocation9 + $0x8] sm:$0xff]
    %v471 = vld [vmem:[#allocation9 + $0x10] sm:$0xff]
    %v472 = vld [vmem:[#allocation9 + $0x18] sm:$0xff]
    %v473 = vld [vmem:[#allocation9 + $0x20] sm:$0xff]
    %v474 = vld [vmem:[#allocation9 + $0x28] sm:$0xff]
    %v475 = vld [vmem:[#allocation9 + $0x30] sm:$0xff]
    %v476 = vld [vmem:[#allocation9 + $0x38] sm:$0xff]
    %v477 = vld [vmem:[#allocation9 + $0x40] sm:$0xff]
    %v478 = vld [vmem:[#allocation9 + $0x48] sm:$0xff]
    %v479 = vld [vmem:[#allocation9 + $0x50] sm:$0xff]
    %v480 = vld [vmem:[#allocation9 + $0x58] sm:$0xff]
    %v481 = vld [vmem:[#allocation9 + $0x60] sm:$0xff]
    %v482 = vld [vmem:[#allocation9 + $0x68] sm:$0xff]
    %v483 = vld [vmem:[#allocation9 + $0x70] sm:$0xff]
    %v484 = vld [vmem:[#allocation9 + $0x78] sm:$0xff]
    %v485 = vld [vmem:[#allocation9 + $0x80] sm:$0xff]
    %v486 = vld [vmem:[#allocation9 + $0x88] sm:$0xff]
    %v487 = vld [vmem:[#allocation9 + $0x90] sm:$0xff]
    %v488 = vld [vmem:[#allocation9 + $0x98] sm:$0xff]
    %v489 = vld [vmem:[#allocation9 + $0xa0] sm:$0xff]
    %v490 = vld [vmem:[#allocation9 + $0xa8] sm:$0xff]
    %v491 = vld [vmem:[#allocation9 + $0xb0] sm:$0xff]
    %v492 = vld [vmem:[#allocation9 + $0xb8] sm:$0xff]
    %v493 = vld [vmem:[#allocation9 + $0xc0] sm:$0xff]
    %v494 = vld [vmem:[#allocation9 + $0xc8] sm:$0xff]
    %v495 = vld [vmem:[#allocation9 + $0xd0] sm:$0xff]
    %v496 = vld [vmem:[#allocation9 + $0xd8] sm:$0xff]
    %v497 = vld [vmem:[#allocation9 + $0xe0] sm:$0xff]
    %v498 = vld [vmem:[#allocation9 + $0xe8] sm:$0xff]
    %v499 = vld [vmem:[#allocation9 + $0xf0] sm:$0xff]
    %v500 = vld [vmem:[#allocation9 + $0xf8] sm:$0xff]
    %v501 = vld [vmem:[#allocation9 + $0x100] sm:$0xff]
    %v502 = vld [vmem:[#allocation9 + $0x108] sm:$0xff]
    %v503 = vld [vmem:[#allocation9 + $0x110] sm:$0xff]
    %v504 = vld [vmem:[#allocation9 + $0x118] sm:$0xff]
    %v505 = vld [vmem:[#allocation9 + $0x120] sm:$0xff]
    %v506 = vld [vmem:[#allocation9 + $0x128] sm:$0xff]
    %v507 = vld [vmem:[#allocation9 + $0x130] sm:$0xff]
    %v508 = vld [vmem:[#allocation9 + $0x138] sm:$0xff]
    %v509 = vld [vmem:[#allocation9 + $0x140] sm:$0xff]
    %v510 = vld [vmem:[#allocation9 + $0x148] sm:$0xff]
    %v511 = vld [vmem:[#allocation9 + $0x150] sm:$0xff]
    %v512 = vld [vmem:[#allocation9 + $0x158] sm:$0xff]
    %v513 = vld [vmem:[#allocation9 + $0x160] sm:$0xff]
    %v514 = vld [vmem:[#allocation9 + $0x168] sm:$0xff]
    %v515 = vld [vmem:[#allocation9 + $0x170] sm:$0xff]
    %v516 = vld [vmem:[#allocation9 + $0x178] sm:$0xff]
    %v517 = vld [vmem:[#allocation9 + $0x180] sm:$0xff]
    %v518 = vld [vmem:[#allocation9 + $0x188] sm:$0xff]
    %v519 = vld [vmem:[#allocation9 + $0x190] sm:$0xff]
    %v520 = vld [vmem:[#allocation9 + $0x198] sm:$0xff]
    %v521 = vld [vmem:[#allocation9 + $0x1a0] sm:$0xff]
    %v522 = vld [vmem:[#allocation9 + $0x1a8] sm:$0xff]
    %v523 = vld [vmem:[#allocation9 + $0x1b0] sm:$0xff]
    %v524 = vld [vmem:[#allocation9 + $0x1b8] sm:$0xff]
    %v525 = vld [vmem:[#allocation9 + $0x1c0] sm:$0xff]
    %v526 = vld [vmem:[#allocation9 + $0x1c8] sm:$0xff]
    %v527 = vld [vmem:[#allocation9 + $0x1d0] sm:$0xff]
    %v528 = vld [vmem:[#allocation9 + $0x1d8] sm:$0xff]
    %v529 = vld [vmem:[#allocation9 + $0x1e0] sm:$0xff]
    %v530 = vld [vmem:[#allocation9 + $0x1e8] sm:$0xff]
    %v531 = vld [vmem:[#allocation9 + $0x1f0] sm:$0xff]
    %v532 = vld [vmem:[#allocation9 + $0x1f8] sm:$0xff]
    %v533 = vld [vmem:[#allocation9 + $0x200] sm:$0xff]
    %v534 = vld [vmem:[#allocation9 + $0x208] sm:$0xff]
    %v535 = vld [vmem:[#allocation9 + $0x210] sm:$0xff]
    %v536 = vld [vmem:[#allocation9 + $0x218] sm:$0xff]
    %v537 = vld [vmem:[#allocation9 + $0x220] sm:$0xff]
    %v538 = vld [vmem:[#allocation9 + $0x228] sm:$0xff]
    %v539 = vld [vmem:[#allocation9 + $0x230] sm:$0xff]
    %v540 = vld [vmem:[#allocation9 + $0x238] sm:$0xff]
    %v541 = vld [vmem:[#allocation9 + $0x240] sm:$0xff]
    %v542 = vld [vmem:[#allocation9 + $0x248] sm:$0xff]
    %v543 = vld [vmem:[#allocation9 + $0x250] sm:$0xff]
    %v544 = vld [vmem:[#allocation9 + $0x258] sm:$0xff]
    %v545 = vld [vmem:[#allocation9 + $0x260] sm:$0xff]
    %v546 = vld [vmem:[#allocation9 + $0x268] sm:$0xff]
    %v547 = vld [vmem:[#allocation9 + $0x270] sm:$0xff]
    %v548 = vld [vmem:[#allocation9 + $0x278] sm:$0xff]
    %v549 = vld [vmem:[#allocation9 + $0x280] sm:$0xff]
    %v550 = vld [vmem:[#allocation9 + $0x288] sm:$0xff]
    %v551 = vld [vmem:[#allocation9 + $0x290] sm:$0xff]
    %v552 = vld [vmem:[#allocation9 + $0x298] sm:$0xff]
    %v553 = vld [vmem:[#allocation9 + $0x2a0] sm:$0xff]
    %v554 = vld [vmem:[#allocation9 + $0x2a8] sm:$0xff]
    %v555 = vld [vmem:[#allocation9 + $0x2b0] sm:$0xff]
    %v556 = vld [vmem:[#allocation9 + $0x2b8] sm:$0xff]
    %v557 = vld [vmem:[#allocation9 + $0x2c0] sm:$0xff]
    %v558 = vld [vmem:[#allocation9 + $0x2c8] sm:$0xff]
    %v559 = vld [vmem:[#allocation9 + $0x2d0] sm:$0xff]
    %v560 = vld [vmem:[#allocation9 + $0x2d8] sm:$0xff]
    %v561 = vld [vmem:[#allocation9 + $0x2e0] sm:$0xff]
    %v562 = vld [vmem:[#allocation9 + $0x2e8] sm:$0xff]
    %v563 = vld [vmem:[#allocation9 + $0x2f0] sm:$0xff]
    %v564 = vld [vmem:[#allocation9 + $0x2f8] sm:$0xff]
    %v565 = vld [vmem:[#allocation9 + $0x300] sm:$0xff]
    %v566 = vld [vmem:[#allocation9 + $0x308] sm:$0xff]
    %v567 = vld [vmem:[#allocation9 + $0x310] sm:$0xff]
    %v568 = vld [vmem:[#allocation9 + $0x318] sm:$0xff]
    %v569 = vld [vmem:[#allocation9 + $0x320] sm:$0xff]
    %v570 = vld [vmem:[#allocation9 + $0x328] sm:$0xff]
    %v571 = vld [vmem:[#allocation9 + $0x330] sm:$0xff]
    %v572 = vld [vmem:[#allocation9 + $0x338] sm:$0xff]
    %v573 = vld [vmem:[#allocation9 + $0x340] sm:$0xff]
    %v574 = vld [vmem:[#allocation9 + $0x348] sm:$0xff]
    %v575 = vld [vmem:[#allocation9 + $0x350] sm:$0xff]
    %v576 = vld [vmem:[#allocation9 + $0x358] sm:$0xff]
    %v577 = vld [vmem:[#allocation9 + $0x360] sm:$0xff]
    %v578 = vld [vmem:[#allocation9 + $0x368] sm:$0xff]
    %v579 = vld [vmem:[#allocation9 + $0x370] sm:$0xff]
    %v580 = vld [vmem:[#allocation9 + $0x378] sm:$0xff]
    %v581 = vld [vmem:[#allocation9 + $0x380] sm:$0xff]
    %v582 = vld [vmem:[#allocation9 + $0x388] sm:$0xff]
    %v583 = vld [vmem:[#allocation9 + $0x390] sm:$0xff]
    %v584 = vld [vmem:[#allocation9 + $0x398] sm:$0xff]
    %v585 = vld [vmem:[#allocation9 + $0x3a0] sm:$0xff]
    %v586 = vld [vmem:[#allocation9 + $0x3a8] sm:$0xff]
    %v587 = vld [vmem:[#allocation9 + $0x3b0] sm:$0xff]
    %v588 = vld [vmem:[#allocation9 + $0x3b8] sm:$0xff]
    %v589 = vld [vmem:[#allocation9 + $0x3c0] sm:$0xff]
    %v590 = vld [vmem:[#allocation9 + $0x3c8] sm:$0xff]
    %v591 = vld [vmem:[#allocation9 + $0x3d0] sm:$0xff]
    %v592 = vld [vmem:[#allocation9 + $0x3d8] sm:$0xff]
    %v593 = vld [vmem:[#allocation9 + $0x3e0] sm:$0xff]
    %v594 = vld [vmem:[#allocation9 + $0x3e8] sm:$0xff]
    %v595 = vld [vmem:[#allocation9 + $0x3f0] sm:$0xff]
    %v596 = vld [vmem:[#allocation9 + $0x3f8] sm:$0xff]
    %v597 = vld [vmem:[#allocation9 + $0x400] sm:$0xff]
    %v598 = vld [vmem:[#allocation9 + $0x408] sm:$0xff]
    %v599 = vld [vmem:[#allocation9 + $0x410] sm:$0xff]
    %v600 = vld [vmem:[#allocation9 + $0x418] sm:$0xff]
    %v601 = vld [vmem:[#allocation9 + $0x420] sm:$0xff]
    %v602 = vld [vmem:[#allocation9 + $0x428] sm:$0xff]
    %v603 = vld [vmem:[#allocation9 + $0x430] sm:$0xff]
    %v604 = vld [vmem:[#allocation9 + $0x438] sm:$0xff]
    %v605 = vld [vmem:[#allocation9 + $0x440] sm:$0xff]
    %v606 = vld [vmem:[#allocation9 + $0x448] sm:$0xff]
    %v607 = vld [vmem:[#allocation9 + $0x450] sm:$0xff]
    %v608 = vld [vmem:[#allocation9 + $0x458] sm:$0xff]
    %v609 = vld [vmem:[#allocation9 + $0x460] sm:$0xff]
    %v610 = vld [vmem:[#allocation9 + $0x468] sm:$0xff]
    %v611 = vld [vmem:[#allocation9 + $0x470] sm:$0xff]
    %v612 = vld [vmem:[#allocation9 + $0x478] sm:$0xff]
    %v613 = vld [vmem:[#allocation9 + $0x480] sm:$0xff]
    %v614 = vld [vmem:[#allocation9 + $0x488] sm:$0xff]
    %v615 = vld [vmem:[#allocation9 + $0x490] sm:$0xff]
    %v616 = vld [vmem:[#allocation9 + $0x498] sm:$0xff]
    %v617 = vld [vmem:[#allocation9 + $0x4a0] sm:$0xff]
    %v618 = vld [vmem:[#allocation9 + $0x4a8] sm:$0xff]
    %v619 = vld [vmem:[#allocation9 + $0x4b0] sm:$0xff]
    %v620 = vld [vmem:[#allocation9 + $0x4b8] sm:$0xff]
    %v621 = vld [vmem:[#allocation9 + $0x4c0] sm:$0xff]
    %v622 = vld [vmem:[#allocation9 + $0x4c8] sm:$0xff]
    %v623 = vld [vmem:[#allocation9 + $0x4d0] sm:$0xff]
    %v624 = vld [vmem:[#allocation9 + $0x4d8] sm:$0xff]
    %v625 = vld [vmem:[#allocation9 + $0x4e0] sm:$0xff]
    %v626 = vld [vmem:[#allocation9 + $0x4e8] sm:$0xff]
    %v627 = vld [vmem:[#allocation9 + $0x4f0] sm:$0xff]
    %v628 = vld [vmem:[#allocation9 + $0x4f8] sm:$0xff]
    %v629 = vld [vmem:[#allocation9 + $0x500] sm:$0xff]
    %v630 = vld [vmem:[#allocation9 + $0x508] sm:$0xff]
    %v631 = vld [vmem:[#allocation9 + $0x510] sm:$0xff]
    %v632 = vld [vmem:[#allocation9 + $0x518] sm:$0xff]
    %v633 = vld [vmem:[#allocation9 + $0x520] sm:$0xff]
    %v634 = vld [vmem:[#allocation9 + $0x528] sm:$0xff]
    %v635 = vld [vmem:[#allocation9 + $0x530] sm:$0xff]
    %v636 = vld [vmem:[#allocation9 + $0x538] sm:$0xff]
    %v637 = vld [vmem:[#allocation9 + $0x540] sm:$0xff]
    %v638 = vld [vmem:[#allocation9 + $0x548] sm:$0xff]
    %v639 = vld [vmem:[#allocation9 + $0x550] sm:$0xff]
    %v640 = vld [vmem:[#allocation9 + $0x558] sm:$0xff]
    %v641 = vld [vmem:[#allocation9 + $0x560] sm:$0xff]
    %v642 = vld [vmem:[#allocation9 + $0x568] sm:$0xff]
    %v643 = vld [vmem:[#allocation9 + $0x570] sm:$0xff]
    %v644 = vld [vmem:[#allocation9 + $0x578] sm:$0xff]
    %v645 = vld [vmem:[#allocation9 + $0x580] sm:$0xff]
    %v646 = vld [vmem:[#allocation9 + $0x588] sm:$0xff]
    %v647 = vld [vmem:[#allocation9 + $0x590] sm:$0xff]
    %v648 = vld [vmem:[#allocation9 + $0x598] sm:$0xff]
    %v649 = vld [vmem:[#allocation9 + $0x5a0] sm:$0xff]
    %v650 = vld [vmem:[#allocation9 + $0x5a8] sm:$0xff]
    %v651 = vld [vmem:[#allocation9 + $0x5b0] sm:$0xff]
    %v652 = vld [vmem:[#allocation9 + $0x5b8] sm:$0xff]
    %v653 = vld [vmem:[#allocation9 + $0x5c0] sm:$0xff]
    %v654 = vld [vmem:[#allocation9 + $0x5c8] sm:$0xff]
    %v655 = vld [vmem:[#allocation9 + $0x5d0] sm:$0xff]
    %v656 = vld [vmem:[#allocation9 + $0x5d8] sm:$0xff]
    %v657 = vld [vmem:[#allocation9 + $0x5e0] sm:$0xff]
    %v658 = vld [vmem:[#allocation9 + $0x5e8] sm:$0xff]
    %v659 = vld [vmem:[#allocation9 + $0x5f0] sm:$0xff]
    %v660 = vld [vmem:[#allocation9 + $0x5f8] sm:$0xff]
    %v661 = vld [vmem:[#allocation9 + $0x600] sm:$0xff]
    %v662 = vld [vmem:[#allocation9 + $0x608] sm:$0xff]
    %v663 = vld [vmem:[#allocation9 + $0x610] sm:$0xff]
    %v664 = vld [vmem:[#allocation9 + $0x618] sm:$0xff]
    %v665 = vld [vmem:[#allocation9 + $0x620] sm:$0xff]
    %v666 = vld [vmem:[#allocation9 + $0x628] sm:$0xff]
    %v667 = vld [vmem:[#allocation9 + $0x630] sm:$0xff]
    %v668 = vld [vmem:[#allocation9 + $0x638] sm:$0xff]
    %v669 = vld [vmem:[#allocation9 + $0x640] sm:$0xff]
    %v670 = vld [vmem:[#allocation9 + $0x648] sm:$0xff]
    %v671 = vld [vmem:[#allocation9 + $0x650] sm:$0xff]
    %v672 = vld [vmem:[#allocation9 + $0x658] sm:$0xff]
    %v673 = vld [vmem:[#allocation9 + $0x660] sm:$0xff]
    %v674 = vld [vmem:[#allocation9 + $0x668] sm:$0xff]
    %v675 = vld [vmem:[#allocation9 + $0x670] sm:$0xff]
    %v676 = vld [vmem:[#allocation9 + $0x678] sm:$0xff]
    %v677 = vld [vmem:[#allocation9 + $0x680] sm:$0xff]
    %v678 = vld [vmem:[#allocation9 + $0x688] sm:$0xff]
    %v679 = vld [vmem:[#allocation9 + $0x690] sm:$0xff]
    %v680 = vld [vmem:[#allocation9 + $0x698] sm:$0xff]
    %v681 = vld [vmem:[#allocation9 + $0x6a0] sm:$0xff]
    %v682 = vld [vmem:[#allocation9 + $0x6a8] sm:$0xff]
    %v683 = vld [vmem:[#allocation9 + $0x6b0] sm:$0xff]
    %v684 = vld [vmem:[#allocation9 + $0x6b8] sm:$0xff]
    %v685 = vld [vmem:[#allocation9 + $0x6c0] sm:$0xff]
    %v686 = vld [vmem:[#allocation9 + $0x6c8] sm:$0xff]
    %v687 = vld [vmem:[#allocation9 + $0x6d0] sm:$0xff]
    %v688 = vld [vmem:[#allocation9 + $0x6d8] sm:$0xff]
    %v689 = vld [vmem:[#allocation9 + $0x6e0] sm:$0xff]
    %v690 = vld [vmem:[#allocation9 + $0x6e8] sm:$0xff]
    %v691 = vld [vmem:[#allocation9 + $0x6f0] sm:$0xff]
    %v692 = vld [vmem:[#allocation9 + $0x6f8] sm:$0xff]
    %v693 = vld [vmem:[#allocation9 + $0x700] sm:$0xff]
    %v694 = vld [vmem:[#allocation9 + $0x708] sm:$0xff]
    %v695 = vld [vmem:[#allocation9 + $0x710] sm:$0xff]
    %v696 = vld [vmem:[#allocation9 + $0x718] sm:$0xff]
    %v697 = vld [vmem:[#allocation9 + $0x720] sm:$0xff]
    %v698 = vld [vmem:[#allocation9 + $0x728] sm:$0xff]
    %v699 = vld [vmem:[#allocation9 + $0x730] sm:$0xff]
    %v700 = vld [vmem:[#allocation9 + $0x738] sm:$0xff]
    %v701 = vld [vmem:[#allocation9 + $0x740] sm:$0xff]
    %v702 = vld [vmem:[#allocation9 + $0x748] sm:$0xff]
    %v703 = vld [vmem:[#allocation9 + $0x750] sm:$0xff]
    %v704 = vld [vmem:[#allocation9 + $0x758] sm:$0xff]
    %v705 = vld [vmem:[#allocation9 + $0x760] sm:$0xff]
    %v706 = vld [vmem:[#allocation9 + $0x768] sm:$0xff]
    %v707 = vld [vmem:[#allocation9 + $0x770] sm:$0xff]
    %v708 = vld [vmem:[#allocation9 + $0x778] sm:$0xff]
    %v709 = vld [vmem:[#allocation9 + $0x780] sm:$0xff]
    %v710 = vld [vmem:[#allocation9 + $0x788] sm:$0xff]
    %v711 = vld [vmem:[#allocation9 + $0x790] sm:$0xff]
    %v712 = vld [vmem:[#allocation9 + $0x798] sm:$0xff]
    %v713 = vld [vmem:[#allocation9 + $0x7a0] sm:$0xff]
    %v714 = vld [vmem:[#allocation9 + $0x7a8] sm:$0xff]
    %v715 = vld [vmem:[#allocation9 + $0x7b0] sm:$0xff]
    %v716 = vld [vmem:[#allocation9 + $0x7b8] sm:$0xff]
    %v717 = vld [vmem:[#allocation9 + $0x7c0] sm:$0xff]
    %v718 = vld [vmem:[#allocation9 + $0x7c8] sm:$0xff]
    %v719 = vld [vmem:[#allocation9 + $0x7d0] sm:$0xff]
    %v720 = vld [vmem:[#allocation9 + $0x7d8] sm:$0xff]
    %v721 = vld [vmem:[#allocation9 + $0x7e0] sm:$0xff]
    %v722 = vld [vmem:[#allocation9 + $0x7e8] sm:$0xff]
    %v723 = vld [vmem:[#allocation9 + $0x7f0] sm:$0xff]
    %v724 = vld [vmem:[#allocation9 + $0x7f8] sm:$0xff]
    %v725 = vld [vmem:[#allocation9 + $0x800] sm:$0xff]
    %v726 = vld [vmem:[#allocation9 + $0x808] sm:$0xff]
    %v727 = vld [vmem:[#allocation9 + $0x810] sm:$0xff]
    %v728 = vld [vmem:[#allocation9 + $0x818] sm:$0xff]
    %v729 = vld [vmem:[#allocation9 + $0x820] sm:$0xff]
    %v730 = vld [vmem:[#allocation9 + $0x828] sm:$0xff]
    %v731 = vld [vmem:[#allocation9 + $0x830] sm:$0xff]
    %v732 = vld [vmem:[#allocation9 + $0x838] sm:$0xff]
    %v733 = vld [vmem:[#allocation9 + $0x840] sm:$0xff]
    %v734 = vld [vmem:[#allocation9 + $0x848] sm:$0xff]
    %v735 = vld [vmem:[#allocation9 + $0x850] sm:$0xff]
    %v736 = vld [vmem:[#allocation9 + $0x858] sm:$0xff]
    %v737 = vld [vmem:[#allocation9 + $0x860] sm:$0xff]
    %v738 = vld [vmem:[#allocation9 + $0x868] sm:$0xff]
    %v739 = vld [vmem:[#allocation9 + $0x870] sm:$0xff]
    %v740 = vld [vmem:[#allocation9 + $0x878] sm:$0xff]
    %v741 = vld [vmem:[#allocation9 + $0x880] sm:$0xff]
    %v742 = vld [vmem:[#allocation9 + $0x888] sm:$0xff]
    %v743 = vld [vmem:[#allocation9 + $0x890] sm:$0xff]
    %v744 = vld [vmem:[#allocation9 + $0x898] sm:$0xff]
    %v745 = vld [vmem:[#allocation9 + $0x8a0] sm:$0xff]
    %v746 = vld [vmem:[#allocation9 + $0x8a8] sm:$0xff]
    %v747 = vld [vmem:[#allocation9 + $0x8b0] sm:$0xff]
    %v748 = vld [vmem:[#allocation9 + $0x8b8] sm:$0xff]
    %v749 = vld [vmem:[#allocation9 + $0x8c0] sm:$0xff]
    %v750 = vld [vmem:[#allocation9 + $0x8c8] sm:$0xff]
    %v751 = vld [vmem:[#allocation9 + $0x8d0] sm:$0xff]
    %v752 = vld [vmem:[#allocation9 + $0x8d8] sm:$0xff]
    %v753 = vld [vmem:[#allocation9 + $0x8e0] sm:$0xff]
    %v754 = vld [vmem:[#allocation9 + $0x8e8] sm:$0xff]
    %v755 = vld [vmem:[#allocation9 + $0x8f0] sm:$0xff]
    %v756 = vld [vmem:[#allocation9 + $0x8f8] sm:$0xff]
    %v757 = vld [vmem:[#allocation11] sm:$0x3f]
    %v759 = vlaneseq
    %v760 = vshrl.u32 %v759, 7
    %v761 = vsub.s32 0, %v760
    %v762 = vrot.slane %v757, %v761
    %v763 = vlaneseq
    %v764 = vshrl.u32 %v763, 7
    %v765 = vsub.s32 1, %v764
    %v766 = vrot.slane %v757, %v765
    %v767 = vlaneseq
    %v768 = vshrl.u32 %v767, 7
    %v769 = vsub.s32 2, %v768
    %v770 = vrot.slane %v757, %v769
    %v771 = vlaneseq
    %v772 = vshrl.u32 %v771, 7
    %v773 = vsub.s32 3, %v772
    %v774 = vrot.slane %v757, %v773
    %v775 = vlaneseq
    %v776 = vshrl.u32 %v775, 7
    %v777 = vsub.s32 4, %v776
    %v778 = vrot.slane %v757, %v777
    %v779 = vlaneseq
    %v780 = vshrl.u32 %v779, 7
    %v781 = vsub.s32 5, %v780
    %v782 = vrot.slane %v757, %v781
    %v1077 = vunpack.c.l.b16 %v469
    %v1078 = vunpack.c.h.b16 %v469
    %v1079 = vunpack.c.l.b16 %v470
    %v1080 = vunpack.c.h.b16 %v470
    %v1081 = vunpack.c.l.b16 %v471
    %v1082 = vunpack.c.h.b16 %v471
    %v1083 = vunpack.c.l.b16 %v472
    %v1084 = vunpack.c.h.b16 %v472
    %v1085 = vunpack.c.l.b16 %v473
    %v1086 = vunpack.c.h.b16 %v473
    %v1087 = vunpack.c.l.b16 %v474
    %v1088 = vunpack.c.h.b16 %v474
    %v1089 = vunpack.c.l.b16 %v475
    %v1090 = vunpack.c.h.b16 %v475
    %v1091 = vunpack.c.l.b16 %v476
    %v1092 = vunpack.c.h.b16 %v476
    %v1093 = vunpack.c.l.b16 %v477
    %v1094 = vunpack.c.h.b16 %v477
    %v1095 = vunpack.c.l.b16 %v478
    %v1096 = vunpack.c.h.b16 %v478
    %v1097 = vunpack.c.l.b16 %v479
    %v1098 = vunpack.c.h.b16 %v479
    %v1099 = vunpack.c.l.b16 %v480
    %v1100 = vunpack.c.h.b16 %v480
    %v1101 = vunpack.c.l.b16 %v481
    %v1102 = vunpack.c.h.b16 %v481
    %v1103 = vunpack.c.l.b16 %v482
    %v1104 = vunpack.c.h.b16 %v482
    %v1105 = vunpack.c.l.b16 %v483
    %v1106 = vunpack.c.h.b16 %v483
    %v1107 = vunpack.c.l.b16 %v484
    %v1108 = vunpack.c.h.b16 %v484
    %v1109 = vunpack.c.l.b16 %v485
    %v1110 = vunpack.c.h.b16 %v485
    %v1111 = vunpack.c.l.b16 %v486
    %v1112 = vunpack.c.h.b16 %v486
    %v1113 = vunpack.c.l.b16 %v487
    %v1114 = vunpack.c.h.b16 %v487
    %v1115 = vunpack.c.l.b16 %v488
    %v1116 = vunpack.c.h.b16 %v488
    %v1117 = vunpack.c.l.b16 %v489
    %v1118 = vunpack.c.h.b16 %v489
    %v1119 = vunpack.c.l.b16 %v490
    %v1120 = vunpack.c.h.b16 %v490
    %v1121 = vunpack.c.l.b16 %v491
    %v1122 = vunpack.c.h.b16 %v491
    %v1123 = vunpack.c.l.b16 %v492
    %v1124 = vunpack.c.h.b16 %v492
    %v1125 = vunpack.c.l.b16 %v493
    %v1126 = vunpack.c.h.b16 %v493
    %v1127 = vunpack.c.l.b16 %v494
    %v1128 = vunpack.c.h.b16 %v494
    %v1129 = vunpack.c.l.b16 %v495
    %v1130 = vunpack.c.h.b16 %v495
    %v1131 = vunpack.c.l.b16 %v496
    %v1132 = vunpack.c.h.b16 %v496
    %v1133 = vunpack.c.l.b16 %v497
    %v1134 = vunpack.c.h.b16 %v497
    %v1135 = vunpack.c.l.b16 %v498
    %v1136 = vunpack.c.h.b16 %v498
    %v1137 = vunpack.c.l.b16 %v499
    %v1138 = vunpack.c.h.b16 %v499
    %v1139 = vunpack.c.l.b16 %v500
    %v1140 = vunpack.c.h.b16 %v500
    %v1141 = vunpack.c.l.b16 %v501
    %v1142 = vunpack.c.h.b16 %v501
    %v1143 = vunpack.c.l.b16 %v502
    %v1144 = vunpack.c.h.b16 %v502
    %v1145 = vunpack.c.l.b16 %v503
    %v1146 = vunpack.c.h.b16 %v503
    %v1147 = vunpack.c.l.b16 %v504
    %v1148 = vunpack.c.h.b16 %v504
    %v1149 = vunpack.c.l.b16 %v505
    %v1150 = vunpack.c.h.b16 %v505
    %v1151 = vunpack.c.l.b16 %v506
    %v1152 = vunpack.c.h.b16 %v506
    %v1153 = vunpack.c.l.b16 %v507
    %v1154 = vunpack.c.h.b16 %v507
    %v1155 = vunpack.c.l.b16 %v508
    %v1156 = vunpack.c.h.b16 %v508
    %v1157 = vunpack.c.l.b16 %v509
    %v1158 = vunpack.c.h.b16 %v509
    %v1159 = vunpack.c.l.b16 %v510
    %v1160 = vunpack.c.h.b16 %v510
    %v1161 = vunpack.c.l.b16 %v511
    %v1162 = vunpack.c.h.b16 %v511
    %v1163 = vunpack.c.l.b16 %v512
    %v1164 = vunpack.c.h.b16 %v512
    %v1165 = vunpack.c.l.b16 %v513
    %v1166 = vunpack.c.h.b16 %v513
    %v1167 = vunpack.c.l.b16 %v514
    %v1168 = vunpack.c.h.b16 %v514
    %v1169 = vunpack.c.l.b16 %v515
    %v1170 = vunpack.c.h.b16 %v515
    %v1171 = vunpack.c.l.b16 %v516
    %v1172 = vunpack.c.h.b16 %v516
    %v1173 = vunpack.c.l.b16 %v517
    %v1174 = vunpack.c.h.b16 %v517
    %v1175 = vunpack.c.l.b16 %v518
    %v1176 = vunpack.c.h.b16 %v518
    %v1177 = vunpack.c.l.b16 %v519
    %v1178 = vunpack.c.h.b16 %v519
    %v1179 = vunpack.c.l.b16 %v520
    %v1180 = vunpack.c.h.b16 %v520
    %v1181 = vunpack.c.l.b16 %v521
    %v1182 = vunpack.c.h.b16 %v521
    %v1183 = vunpack.c.l.b16 %v522
    %v1184 = vunpack.c.h.b16 %v522
    %v1185 = vunpack.c.l.b16 %v523
    %v1186 = vunpack.c.h.b16 %v523
    %v1187 = vunpack.c.l.b16 %v524
    %v1188 = vunpack.c.h.b16 %v524
    %v1189 = vunpack.c.l.b16 %v525
    %v1190 = vunpack.c.h.b16 %v525
    %v1191 = vunpack.c.l.b16 %v526
    %v1192 = vunpack.c.h.b16 %v526
    %v1193 = vunpack.c.l.b16 %v527
    %v1194 = vunpack.c.h.b16 %v527
    %v1195 = vunpack.c.l.b16 %v528
    %v1196 = vunpack.c.h.b16 %v528
    %v1197 = vunpack.c.l.b16 %v529
    %v1198 = vunpack.c.h.b16 %v529
    %v1199 = vunpack.c.l.b16 %v530
    %v1200 = vunpack.c.h.b16 %v530
    %v1201 = vunpack.c.l.b16 %v531
    %v1202 = vunpack.c.h.b16 %v531
    %v1203 = vunpack.c.l.b16 %v532
    %v1204 = vunpack.c.h.b16 %v532
    %v1205 = vunpack.c.l.b16 %v533
    %v1206 = vunpack.c.h.b16 %v533
    %v1207 = vunpack.c.l.b16 %v534
    %v1208 = vunpack.c.h.b16 %v534
    %v1209 = vunpack.c.l.b16 %v535
    %v1210 = vunpack.c.h.b16 %v535
    %v1211 = vunpack.c.l.b16 %v536
    %v1212 = vunpack.c.h.b16 %v536
    %v1213 = vunpack.c.l.b16 %v537
    %v1214 = vunpack.c.h.b16 %v537
    %v1215 = vunpack.c.l.b16 %v538
    %v1216 = vunpack.c.h.b16 %v538
    %v1217 = vunpack.c.l.b16 %v539
    %v1218 = vunpack.c.h.b16 %v539
    %v1219 = vunpack.c.l.b16 %v540
    %v1220 = vunpack.c.h.b16 %v540
    %v1221 = vunpack.c.l.b16 %v541
    %v1222 = vunpack.c.h.b16 %v541
    %v1223 = vunpack.c.l.b16 %v542
    %v1224 = vunpack.c.h.b16 %v542
    %v1225 = vunpack.c.l.b16 %v543
    %v1226 = vunpack.c.h.b16 %v543
    %v1227 = vunpack.c.l.b16 %v544
    %v1228 = vunpack.c.h.b16 %v544
    %v1229 = vunpack.c.l.b16 %v545
    %v1230 = vunpack.c.h.b16 %v545
    %v1231 = vunpack.c.l.b16 %v546
    %v1232 = vunpack.c.h.b16 %v546
    %v1233 = vunpack.c.l.b16 %v547
    %v1234 = vunpack.c.h.b16 %v547
    %v1235 = vunpack.c.l.b16 %v548
    %v1236 = vunpack.c.h.b16 %v548
    %v1237 = vunpack.c.l.b16 %v549
    %v1238 = vunpack.c.h.b16 %v549
    %v1239 = vunpack.c.l.b16 %v550
    %v1240 = vunpack.c.h.b16 %v550
    %v1241 = vunpack.c.l.b16 %v551
    %v1242 = vunpack.c.h.b16 %v551
    %v1243 = vunpack.c.l.b16 %v552
    %v1244 = vunpack.c.h.b16 %v552
    %v1245 = vunpack.c.l.b16 %v553
    %v1246 = vunpack.c.h.b16 %v553
    %v1247 = vunpack.c.l.b16 %v554
    %v1248 = vunpack.c.h.b16 %v554
    %v1249 = vunpack.c.l.b16 %v555
    %v1250 = vunpack.c.h.b16 %v555
    %v1251 = vunpack.c.l.b16 %v556
    %v1252 = vunpack.c.h.b16 %v556
    %v1253 = vunpack.c.l.b16 %v557
    %v1254 = vunpack.c.h.b16 %v557
    %v1255 = vunpack.c.l.b16 %v558
    %v1256 = vunpack.c.h.b16 %v558
    %v1257 = vunpack.c.l.b16 %v559
    %v1258 = vunpack.c.h.b16 %v559
    %v1259 = vunpack.c.l.b16 %v560
    %v1260 = vunpack.c.h.b16 %v560
    %v1261 = vunpack.c.l.b16 %v561
    %v1262 = vunpack.c.h.b16 %v561
    %v1263 = vunpack.c.l.b16 %v562
    %v1264 = vunpack.c.h.b16 %v562
    %v1265 = vunpack.c.l.b16 %v563
    %v1266 = vunpack.c.h.b16 %v563
    %v1267 = vunpack.c.l.b16 %v564
    %v1268 = vunpack.c.h.b16 %v564
    %v1269 = vunpack.c.l.b16 %v565
    %v1270 = vunpack.c.h.b16 %v565
    %v1271 = vunpack.c.l.b16 %v566
    %v1272 = vunpack.c.h.b16 %v566
    %v1273 = vunpack.c.l.b16 %v567
    %v1274 = vunpack.c.h.b16 %v567
    %v1275 = vunpack.c.l.b16 %v568
    %v1276 = vunpack.c.h.b16 %v568
    %v1277 = vunpack.c.l.b16 %v569
    %v1278 = vunpack.c.h.b16 %v569
    %v1279 = vunpack.c.l.b16 %v570
    %v1280 = vunpack.c.h.b16 %v570
    %v1281 = vunpack.c.l.b16 %v571
    %v1282 = vunpack.c.h.b16 %v571
    %v1283 = vunpack.c.l.b16 %v572
    %v1284 = vunpack.c.h.b16 %v572
    %v1285 = vunpack.c.l.b16 %v573
    %v1286 = vunpack.c.h.b16 %v573
    %v1287 = vunpack.c.l.b16 %v574
    %v1288 = vunpack.c.h.b16 %v574
    %v1289 = vunpack.c.l.b16 %v575
    %v1290 = vunpack.c.h.b16 %v575
    %v1291 = vunpack.c.l.b16 %v576
    %v1292 = vunpack.c.h.b16 %v576
    %v1293 = vunpack.c.l.b16 %v577
    %v1294 = vunpack.c.h.b16 %v577
    %v1295 = vunpack.c.l.b16 %v578
    %v1296 = vunpack.c.h.b16 %v578
    %v1297 = vunpack.c.l.b16 %v579
    %v1298 = vunpack.c.h.b16 %v579
    %v1299 = vunpack.c.l.b16 %v580
    %v1300 = vunpack.c.h.b16 %v580
    %v1301 = vunpack.c.l.b16 %v581
    %v1302 = vunpack.c.h.b16 %v581
    %v1303 = vunpack.c.l.b16 %v582
    %v1304 = vunpack.c.h.b16 %v582
    %v1305 = vunpack.c.l.b16 %v583
    %v1306 = vunpack.c.h.b16 %v583
    %v1307 = vunpack.c.l.b16 %v584
    %v1308 = vunpack.c.h.b16 %v584
    %v1309 = vunpack.c.l.b16 %v585
    %v1310 = vunpack.c.h.b16 %v585
    %v1311 = vunpack.c.l.b16 %v586
    %v1312 = vunpack.c.h.b16 %v586
    %v1313 = vunpack.c.l.b16 %v587
    %v1314 = vunpack.c.h.b16 %v587
    %v1315 = vunpack.c.l.b16 %v588
    %v1316 = vunpack.c.h.b16 %v588
    %v1317 = vunpack.c.l.b16 %v589
    %v1318 = vunpack.c.h.b16 %v589
    %v1319 = vunpack.c.l.b16 %v590
    %v1320 = vunpack.c.h.b16 %v590
    %v1321 = vunpack.c.l.b16 %v591
    %v1322 = vunpack.c.h.b16 %v591
    %v1323 = vunpack.c.l.b16 %v592
    %v1324 = vunpack.c.h.b16 %v592
    %v1325 = vunpack.c.l.b16 %v593
    %v1326 = vunpack.c.h.b16 %v593
    %v1327 = vunpack.c.l.b16 %v594
    %v1328 = vunpack.c.h.b16 %v594
    %v1329 = vunpack.c.l.b16 %v595
    %v1330 = vunpack.c.h.b16 %v595
    %v1331 = vunpack.c.l.b16 %v596
    %v1332 = vunpack.c.h.b16 %v596
    %v1333 = vunpack.c.l.b16 %v597
    %v1334 = vunpack.c.h.b16 %v597
    %v1335 = vunpack.c.l.b16 %v598
    %v1336 = vunpack.c.h.b16 %v598
    %v1337 = vunpack.c.l.b16 %v599
    %v1338 = vunpack.c.h.b16 %v599
    %v1339 = vunpack.c.l.b16 %v600
    %v1340 = vunpack.c.h.b16 %v600
    %v1341 = vunpack.c.l.b16 %v601
    %v1342 = vunpack.c.h.b16 %v601
    %v1343 = vunpack.c.l.b16 %v602
    %v1344 = vunpack.c.h.b16 %v602
    %v1345 = vunpack.c.l.b16 %v603
    %v1346 = vunpack.c.h.b16 %v603
    %v1347 = vunpack.c.l.b16 %v604
    %v1348 = vunpack.c.h.b16 %v604
    %v1349 = vunpack.c.l.b16 %v605
    %v1350 = vunpack.c.h.b16 %v605
    %v1351 = vunpack.c.l.b16 %v606
    %v1352 = vunpack.c.h.b16 %v606
    %v1353 = vunpack.c.l.b16 %v607
    %v1354 = vunpack.c.h.b16 %v607
    %v1355 = vunpack.c.l.b16 %v608
    %v1356 = vunpack.c.h.b16 %v608
    %v1357 = vunpack.c.l.b16 %v609
    %v1358 = vunpack.c.h.b16 %v609
    %v1359 = vunpack.c.l.b16 %v610
    %v1360 = vunpack.c.h.b16 %v610
    %v1361 = vunpack.c.l.b16 %v611
    %v1362 = vunpack.c.h.b16 %v611
    %v1363 = vunpack.c.l.b16 %v612
    %v1364 = vunpack.c.h.b16 %v612
    %v1365 = vunpack.c.l.b16 %v613
    %v1366 = vunpack.c.h.b16 %v613
    %v1367 = vunpack.c.l.b16 %v614
    %v1368 = vunpack.c.h.b16 %v614
    %v1369 = vunpack.c.l.b16 %v615
    %v1370 = vunpack.c.h.b16 %v615
    %v1371 = vunpack.c.l.b16 %v616
    %v1372 = vunpack.c.h.b16 %v616
    %v1373 = vunpack.c.l.b16 %v617
    %v1374 = vunpack.c.h.b16 %v617
    %v1375 = vunpack.c.l.b16 %v618
    %v1376 = vunpack.c.h.b16 %v618
    %v1377 = vunpack.c.l.b16 %v619
    %v1378 = vunpack.c.h.b16 %v619
    %v1379 = vunpack.c.l.b16 %v620
    %v1380 = vunpack.c.h.b16 %v620
    %v1381 = vunpack.c.l.b16 %v621
    %v1382 = vunpack.c.h.b16 %v621
    %v1383 = vunpack.c.l.b16 %v622
    %v1384 = vunpack.c.h.b16 %v622
    %v1385 = vunpack.c.l.b16 %v623
    %v1386 = vunpack.c.h.b16 %v623
    %v1387 = vunpack.c.l.b16 %v624
    %v1388 = vunpack.c.h.b16 %v624
    %v1389 = vunpack.c.l.b16 %v625
    %v1390 = vunpack.c.h.b16 %v625
    %v1391 = vunpack.c.l.b16 %v626
    %v1392 = vunpack.c.h.b16 %v626
    %v1393 = vunpack.c.l.b16 %v627
    %v1394 = vunpack.c.h.b16 %v627
    %v1395 = vunpack.c.l.b16 %v628
    %v1396 = vunpack.c.h.b16 %v628
    %v1397 = vunpack.c.l.b16 %v629
    %v1398 = vunpack.c.h.b16 %v629
    %v1399 = vunpack.c.l.b16 %v630
    %v1400 = vunpack.c.h.b16 %v630
    %v1401 = vunpack.c.l.b16 %v631
    %v1402 = vunpack.c.h.b16 %v631
    %v1403 = vunpack.c.l.b16 %v632
    %v1404 = vunpack.c.h.b16 %v632
    %v1405 = vunpack.c.l.b16 %v633
    %v1406 = vunpack.c.h.b16 %v633
    %v1407 = vunpack.c.l.b16 %v634
    %v1408 = vunpack.c.h.b16 %v634
    %v1409 = vunpack.c.l.b16 %v635
    %v1410 = vunpack.c.h.b16 %v635
    %v1411 = vunpack.c.l.b16 %v636
    %v1412 = vunpack.c.h.b16 %v636
    %v1413 = vunpack.c.l.b16 %v637
    %v1414 = vunpack.c.h.b16 %v637
    %v1415 = vunpack.c.l.b16 %v638
    %v1416 = vunpack.c.h.b16 %v638
    %v1417 = vunpack.c.l.b16 %v639
    %v1418 = vunpack.c.h.b16 %v639
    %v1419 = vunpack.c.l.b16 %v640
    %v1420 = vunpack.c.h.b16 %v640
    %v1421 = vunpack.c.l.b16 %v641
    %v1422 = vunpack.c.h.b16 %v641
    %v1423 = vunpack.c.l.b16 %v642
    %v1424 = vunpack.c.h.b16 %v642
    %v1425 = vunpack.c.l.b16 %v643
    %v1426 = vunpack.c.h.b16 %v643
    %v1427 = vunpack.c.l.b16 %v644
    %v1428 = vunpack.c.h.b16 %v644
    %v1429 = vunpack.c.l.b16 %v645
    %v1430 = vunpack.c.h.b16 %v645
    %v1431 = vunpack.c.l.b16 %v646
    %v1432 = vunpack.c.h.b16 %v646
    %v1433 = vunpack.c.l.b16 %v647
    %v1434 = vunpack.c.h.b16 %v647
    %v1435 = vunpack.c.l.b16 %v648
    %v1436 = vunpack.c.h.b16 %v648
    %v1437 = vunpack.c.l.b16 %v649
    %v1438 = vunpack.c.h.b16 %v649
    %v1439 = vunpack.c.l.b16 %v650
    %v1440 = vunpack.c.h.b16 %v650
    %v1441 = vunpack.c.l.b16 %v651
    %v1442 = vunpack.c.h.b16 %v651
    %v1443 = vunpack.c.l.b16 %v652
    %v1444 = vunpack.c.h.b16 %v652
    %v1445 = vunpack.c.l.b16 %v653
    %v1446 = vunpack.c.h.b16 %v653
    %v1447 = vunpack.c.l.b16 %v654
    %v1448 = vunpack.c.h.b16 %v654
    %v1449 = vunpack.c.l.b16 %v655
    %v1450 = vunpack.c.h.b16 %v655
    %v1451 = vunpack.c.l.b16 %v656
    %v1452 = vunpack.c.h.b16 %v656
    %v1453 = vunpack.c.l.b16 %v657
    %v1454 = vunpack.c.h.b16 %v657
    %v1455 = vunpack.c.l.b16 %v658
    %v1456 = vunpack.c.h.b16 %v658
    %v1457 = vunpack.c.l.b16 %v659
    %v1458 = vunpack.c.h.b16 %v659
    %v1459 = vunpack.c.l.b16 %v660
    %v1460 = vunpack.c.h.b16 %v660
    %v1461 = vunpack.c.l.b16 %v661
    %v1462 = vunpack.c.h.b16 %v661
    %v1463 = vunpack.c.l.b16 %v662
    %v1464 = vunpack.c.h.b16 %v662
    %v1465 = vunpack.c.l.b16 %v663
    %v1466 = vunpack.c.h.b16 %v663
    %v1467 = vunpack.c.l.b16 %v664
    %v1468 = vunpack.c.h.b16 %v664
    %v1469 = vunpack.c.l.b16 %v665
    %v1470 = vunpack.c.h.b16 %v665
    %v1471 = vunpack.c.l.b16 %v666
    %v1472 = vunpack.c.h.b16 %v666
    %v1473 = vunpack.c.l.b16 %v667
    %v1474 = vunpack.c.h.b16 %v667
    %v1475 = vunpack.c.l.b16 %v668
    %v1476 = vunpack.c.h.b16 %v668
    %v1477 = vunpack.c.l.b16 %v669
    %v1478 = vunpack.c.h.b16 %v669
    %v1479 = vunpack.c.l.b16 %v670
    %v1480 = vunpack.c.h.b16 %v670
    %v1481 = vunpack.c.l.b16 %v671
    %v1482 = vunpack.c.h.b16 %v671
    %v1483 = vunpack.c.l.b16 %v672
    %v1484 = vunpack.c.h.b16 %v672
    %v1485 = vunpack.c.l.b16 %v673
    %v1486 = vunpack.c.h.b16 %v673
    %v1487 = vunpack.c.l.b16 %v674
    %v1488 = vunpack.c.h.b16 %v674
    %v1489 = vunpack.c.l.b16 %v675
    %v1490 = vunpack.c.h.b16 %v675
    %v1491 = vunpack.c.l.b16 %v676
    %v1492 = vunpack.c.h.b16 %v676
    %v1493 = vunpack.c.l.b16 %v677
    %v1494 = vunpack.c.h.b16 %v677
    %v1495 = vunpack.c.l.b16 %v678
    %v1496 = vunpack.c.h.b16 %v678
    %v1497 = vunpack.c.l.b16 %v679
    %v1498 = vunpack.c.h.b16 %v679
    %v1499 = vunpack.c.l.b16 %v680
    %v1500 = vunpack.c.h.b16 %v680
    %v1501 = vunpack.c.l.b16 %v681
    %v1502 = vunpack.c.h.b16 %v681
    %v1503 = vunpack.c.l.b16 %v682
    %v1504 = vunpack.c.h.b16 %v682
    %v1505 = vunpack.c.l.b16 %v683
    %v1506 = vunpack.c.h.b16 %v683
    %v1507 = vunpack.c.l.b16 %v684
    %v1508 = vunpack.c.h.b16 %v684
    %v1509 = vunpack.c.l.b16 %v685
    %v1510 = vunpack.c.h.b16 %v685
    %v1511 = vunpack.c.l.b16 %v686
    %v1512 = vunpack.c.h.b16 %v686
    %v1513 = vunpack.c.l.b16 %v687
    %v1514 = vunpack.c.h.b16 %v687
    %v1515 = vunpack.c.l.b16 %v688
    %v1516 = vunpack.c.h.b16 %v688
    %v1517 = vunpack.c.l.b16 %v689
    %v1518 = vunpack.c.h.b16 %v689
    %v1519 = vunpack.c.l.b16 %v690
    %v1520 = vunpack.c.h.b16 %v690
    %v1521 = vunpack.c.l.b16 %v691
    %v1522 = vunpack.c.h.b16 %v691
    %v1523 = vunpack.c.l.b16 %v692
    %v1524 = vunpack.c.h.b16 %v692
    %v1525 = vunpack.c.l.b16 %v693
    %v1526 = vunpack.c.h.b16 %v693
    %v1527 = vunpack.c.l.b16 %v694
    %v1528 = vunpack.c.h.b16 %v694
    %v1529 = vunpack.c.l.b16 %v695
    %v1530 = vunpack.c.h.b16 %v695
    %v1531 = vunpack.c.l.b16 %v696
    %v1532 = vunpack.c.h.b16 %v696
    %v1533 = vunpack.c.l.b16 %v697
    %v1534 = vunpack.c.h.b16 %v697
    %v1535 = vunpack.c.l.b16 %v698
    %v1536 = vunpack.c.h.b16 %v698
    %v1537 = vunpack.c.l.b16 %v699
    %v1538 = vunpack.c.h.b16 %v699
    %v1539 = vunpack.c.l.b16 %v700
    %v1540 = vunpack.c.h.b16 %v700
    %v1541 = vunpack.c.l.b16 %v701
    %v1542 = vunpack.c.h.b16 %v701
    %v1543 = vunpack.c.l.b16 %v702
    %v1544 = vunpack.c.h.b16 %v702
    %v1545 = vunpack.c.l.b16 %v703
    %v1546 = vunpack.c.h.b16 %v703
    %v1547 = vunpack.c.l.b16 %v704
    %v1548 = vunpack.c.h.b16 %v704
    %v1549 = vunpack.c.l.b16 %v705
    %v1550 = vunpack.c.h.b16 %v705
    %v1551 = vunpack.c.l.b16 %v706
    %v1552 = vunpack.c.h.b16 %v706
    %v1553 = vunpack.c.l.b16 %v707
    %v1554 = vunpack.c.h.b16 %v707
    %v1555 = vunpack.c.l.b16 %v708
    %v1556 = vunpack.c.h.b16 %v708
    %v1557 = vunpack.c.l.b16 %v709
    %v1558 = vunpack.c.h.b16 %v709
    %v1559 = vunpack.c.l.b16 %v710
    %v1560 = vunpack.c.h.b16 %v710
    %v1561 = vunpack.c.l.b16 %v711
    %v1562 = vunpack.c.h.b16 %v711
    %v1563 = vunpack.c.l.b16 %v712
    %v1564 = vunpack.c.h.b16 %v712
    %v1565 = vunpack.c.l.b16 %v713
    %v1566 = vunpack.c.h.b16 %v713
    %v1567 = vunpack.c.l.b16 %v714
    %v1568 = vunpack.c.h.b16 %v714
    %v1569 = vunpack.c.l.b16 %v715
    %v1570 = vunpack.c.h.b16 %v715
    %v1571 = vunpack.c.l.b16 %v716
    %v1572 = vunpack.c.h.b16 %v716
    %v1573 = vunpack.c.l.b16 %v717
    %v1574 = vunpack.c.h.b16 %v717
    %v1575 = vunpack.c.l.b16 %v718
    %v1576 = vunpack.c.h.b16 %v718
    %v1577 = vunpack.c.l.b16 %v719
    %v1578 = vunpack.c.h.b16 %v719
    %v1579 = vunpack.c.l.b16 %v720
    %v1580 = vunpack.c.h.b16 %v720
    %v1581 = vunpack.c.l.b16 %v721
    %v1582 = vunpack.c.h.b16 %v721
    %v1583 = vunpack.c.l.b16 %v722
    %v1584 = vunpack.c.h.b16 %v722
    %v1585 = vunpack.c.l.b16 %v723
    %v1586 = vunpack.c.h.b16 %v723
    %v1587 = vunpack.c.l.b16 %v724
    %v1588 = vunpack.c.h.b16 %v724
    %v1589 = vunpack.c.l.b16 %v725
    %v1590 = vunpack.c.h.b16 %v725
    %v1591 = vunpack.c.l.b16 %v726
    %v1592 = vunpack.c.h.b16 %v726
    %v1593 = vunpack.c.l.b16 %v727
    %v1594 = vunpack.c.h.b16 %v727
    %v1595 = vunpack.c.l.b16 %v728
    %v1596 = vunpack.c.h.b16 %v728
    %v1597 = vunpack.c.l.b16 %v729
    %v1598 = vunpack.c.h.b16 %v729
    %v1599 = vunpack.c.l.b16 %v730
    %v1600 = vunpack.c.h.b16 %v730
    %v1601 = vunpack.c.l.b16 %v731
    %v1602 = vunpack.c.h.b16 %v731
    %v1603 = vunpack.c.l.b16 %v732
    %v1604 = vunpack.c.h.b16 %v732
    %v1605 = vunpack.c.l.b16 %v733
    %v1606 = vunpack.c.h.b16 %v733
    %v1607 = vunpack.c.l.b16 %v734
    %v1608 = vunpack.c.h.b16 %v734
    %v1609 = vunpack.c.l.b16 %v735
    %v1610 = vunpack.c.h.b16 %v735
    %v1611 = vunpack.c.l.b16 %v736
    %v1612 = vunpack.c.h.b16 %v736
    %v1613 = vunpack.c.l.b16 %v737
    %v1614 = vunpack.c.h.b16 %v737
    %v1615 = vunpack.c.l.b16 %v738
    %v1616 = vunpack.c.h.b16 %v738
    %v1617 = vunpack.c.l.b16 %v739
    %v1618 = vunpack.c.h.b16 %v739
    %v1619 = vunpack.c.l.b16 %v740
    %v1620 = vunpack.c.h.b16 %v740
    %v1621 = vunpack.c.l.b16 %v741
    %v1622 = vunpack.c.h.b16 %v741
    %v1623 = vunpack.c.l.b16 %v742
    %v1624 = vunpack.c.h.b16 %v742
    %v1625 = vunpack.c.l.b16 %v743
    %v1626 = vunpack.c.h.b16 %v743
    %v1627 = vunpack.c.l.b16 %v744
    %v1628 = vunpack.c.h.b16 %v744
    %v1629 = vunpack.c.l.b16 %v745
    %v1630 = vunpack.c.h.b16 %v745
    %v1631 = vunpack.c.l.b16 %v746
    %v1632 = vunpack.c.h.b16 %v746
    %v1633 = vunpack.c.l.b16 %v747
    %v1634 = vunpack.c.h.b16 %v747
    %v1635 = vunpack.c.l.b16 %v748
    %v1636 = vunpack.c.h.b16 %v748
    %v1637 = vunpack.c.l.b16 %v749
    %v1638 = vunpack.c.h.b16 %v749
    %v1639 = vunpack.c.l.b16 %v750
    %v1640 = vunpack.c.h.b16 %v750
    %v1641 = vunpack.c.l.b16 %v751
    %v1642 = vunpack.c.h.b16 %v751
    %v1643 = vunpack.c.l.b16 %v752
    %v1644 = vunpack.c.h.b16 %v752
    %v1645 = vunpack.c.l.b16 %v753
    %v1646 = vunpack.c.h.b16 %v753
    %v1647 = vunpack.c.l.b16 %v754
    %v1648 = vunpack.c.h.b16 %v754
    %v1649 = vunpack.c.l.b16 %v755
    %v1650 = vunpack.c.h.b16 %v755
    %v1651 = vunpack.c.l.b16 %v756
    %v1652 = vunpack.c.h.b16 %v756
    %v1653 = vpack.c.b16 %v1083, %v1077
    %v1654 = vpack.c.b16 %v1084, %v1078
    %v1655 = vpack.c.b16 %v1085, %v1079
    %v1656 = vpack.c.b16 %v1086, %v1080
    %v1657 = vpack.c.b16 %v1087, %v1081
    %v1658 = vpack.c.b16 %v1088, %v1082
    %v1659 = vpack.c.b16 %v1095, %v1089
    %v1660 = vpack.c.b16 %v1096, %v1090
    %v1661 = vpack.c.b16 %v1097, %v1091
    %v1662 = vpack.c.b16 %v1098, %v1092
    %v1663 = vpack.c.b16 %v1099, %v1093
    %v1664 = vpack.c.b16 %v1100, %v1094
    %v1665 = vpack.c.b16 %v1107, %v1101
    %v1666 = vpack.c.b16 %v1108, %v1102
    %v1667 = vpack.c.b16 %v1109, %v1103
    %v1668 = vpack.c.b16 %v1110, %v1104
    %v1669 = vpack.c.b16 %v1111, %v1105
    %v1670 = vpack.c.b16 %v1112, %v1106
    %v1671 = vpack.c.b16 %v1119, %v1113
    %v1672 = vpack.c.b16 %v1120, %v1114
    %v1673 = vpack.c.b16 %v1121, %v1115
    %v1674 = vpack.c.b16 %v1122, %v1116
    %v1675 = vpack.c.b16 %v1123, %v1117
    %v1676 = vpack.c.b16 %v1124, %v1118
    %v1677 = vpack.c.b16 %v1131, %v1125
    %v1678 = vpack.c.b16 %v1132, %v1126
    %v1679 = vpack.c.b16 %v1133, %v1127
    %v1680 = vpack.c.b16 %v1134, %v1128
    %v1681 = vpack.c.b16 %v1135, %v1129
    %v1682 = vpack.c.b16 %v1136, %v1130
    %v1683 = vpack.c.b16 %v1143, %v1137
    %v1684 = vpack.c.b16 %v1144, %v1138
    %v1685 = vpack.c.b16 %v1145, %v1139
    %v1686 = vpack.c.b16 %v1146, %v1140
    %v1687 = vpack.c.b16 %v1147, %v1141
    %v1688 = vpack.c.b16 %v1148, %v1142
    %v1689 = vpack.c.b16 %v1155, %v1149
    %v1690 = vpack.c.b16 %v1156, %v1150
    %v1691 = vpack.c.b16 %v1157, %v1151
    %v1692 = vpack.c.b16 %v1158, %v1152
    %v1693 = vpack.c.b16 %v1159, %v1153
    %v1694 = vpack.c.b16 %v1160, %v1154
    %v1695 = vpack.c.b16 %v1167, %v1161
    %v1696 = vpack.c.b16 %v1168, %v1162
    %v1697 = vpack.c.b16 %v1169, %v1163
    %v1698 = vpack.c.b16 %v1170, %v1164
    %v1699 = vpack.c.b16 %v1171, %v1165
    %v1700 = vpack.c.b16 %v1172, %v1166
    %v1701 = vpack.c.b16 %v1179, %v1173
    %v1702 = vpack.c.b16 %v1180, %v1174
    %v1703 = vpack.c.b16 %v1181, %v1175
    %v1704 = vpack.c.b16 %v1182, %v1176
    %v1705 = vpack.c.b16 %v1183, %v1177
    %v1706 = vpack.c.b16 %v1184, %v1178
    %v1707 = vpack.c.b16 %v1191, %v1185
    %v1708 = vpack.c.b16 %v1192, %v1186
    %v1709 = vpack.c.b16 %v1193, %v1187
    %v1710 = vpack.c.b16 %v1194, %v1188
    %v1711 = vpack.c.b16 %v1195, %v1189
    %v1712 = vpack.c.b16 %v1196, %v1190
    %v1713 = vpack.c.b16 %v1203, %v1197
    %v1714 = vpack.c.b16 %v1204, %v1198
    %v1715 = vpack.c.b16 %v1205, %v1199
    %v1716 = vpack.c.b16 %v1206, %v1200
    %v1717 = vpack.c.b16 %v1207, %v1201
    %v1718 = vpack.c.b16 %v1208, %v1202
    %v1719 = vpack.c.b16 %v1215, %v1209
    %v1720 = vpack.c.b16 %v1216, %v1210
    %v1721 = vpack.c.b16 %v1217, %v1211
    %v1722 = vpack.c.b16 %v1218, %v1212
    %v1723 = vpack.c.b16 %v1219, %v1213
    %v1724 = vpack.c.b16 %v1220, %v1214
    %v1725 = vpack.c.b16 %v1227, %v1221
    %v1726 = vpack.c.b16 %v1228, %v1222
    %v1727 = vpack.c.b16 %v1229, %v1223
    %v1728 = vpack.c.b16 %v1230, %v1224
    %v1729 = vpack.c.b16 %v1231, %v1225
    %v1730 = vpack.c.b16 %v1232, %v1226
    %v1731 = vpack.c.b16 %v1239, %v1233
    %v1732 = vpack.c.b16 %v1240, %v1234
    %v1733 = vpack.c.b16 %v1241, %v1235
    %v1734 = vpack.c.b16 %v1242, %v1236
    %v1735 = vpack.c.b16 %v1243, %v1237
    %v1736 = vpack.c.b16 %v1244, %v1238
    %v1737 = vpack.c.b16 %v1251, %v1245
    %v1738 = vpack.c.b16 %v1252, %v1246
    %v1739 = vpack.c.b16 %v1253, %v1247
    %v1740 = vpack.c.b16 %v1254, %v1248
    %v1741 = vpack.c.b16 %v1255, %v1249
    %v1742 = vpack.c.b16 %v1256, %v1250
    %v1743 = vpack.c.b16 %v1263, %v1257
    %v1744 = vpack.c.b16 %v1264, %v1258
    %v1745 = vpack.c.b16 %v1265, %v1259
    %v1746 = vpack.c.b16 %v1266, %v1260
    %v1747 = vpack.c.b16 %v1267, %v1261
    %v1748 = vpack.c.b16 %v1268, %v1262
    %v1749 = vpack.c.b16 %v1275, %v1269
    %v1750 = vpack.c.b16 %v1276, %v1270
    %v1751 = vpack.c.b16 %v1277, %v1271
    %v1752 = vpack.c.b16 %v1278, %v1272
    %v1753 = vpack.c.b16 %v1279, %v1273
    %v1754 = vpack.c.b16 %v1280, %v1274
    %v1755 = vpack.c.b16 %v1287, %v1281
    %v1756 = vpack.c.b16 %v1288, %v1282
    %v1757 = vpack.c.b16 %v1289, %v1283
    %v1758 = vpack.c.b16 %v1290, %v1284
    %v1759 = vpack.c.b16 %v1291, %v1285
    %v1760 = vpack.c.b16 %v1292, %v1286
    %v1761 = vpack.c.b16 %v1299, %v1293
    %v1762 = vpack.c.b16 %v1300, %v1294
    %v1763 = vpack.c.b16 %v1301, %v1295
    %v1764 = vpack.c.b16 %v1302, %v1296
    %v1765 = vpack.c.b16 %v1303, %v1297
    %v1766 = vpack.c.b16 %v1304, %v1298
    %v1767 = vpack.c.b16 %v1311, %v1305
    %v1768 = vpack.c.b16 %v1312, %v1306
    %v1769 = vpack.c.b16 %v1313, %v1307
    %v1770 = vpack.c.b16 %v1314, %v1308
    %v1771 = vpack.c.b16 %v1315, %v1309
    %v1772 = vpack.c.b16 %v1316, %v1310
    %v1773 = vpack.c.b16 %v1323, %v1317
    %v1774 = vpack.c.b16 %v1324, %v1318
    %v1775 = vpack.c.b16 %v1325, %v1319
    %v1776 = vpack.c.b16 %v1326, %v1320
    %v1777 = vpack.c.b16 %v1327, %v1321
    %v1778 = vpack.c.b16 %v1328, %v1322
    %v1779 = vpack.c.b16 %v1335, %v1329
    %v1780 = vpack.c.b16 %v1336, %v1330
    %v1781 = vpack.c.b16 %v1337, %v1331
    %v1782 = vpack.c.b16 %v1338, %v1332
    %v1783 = vpack.c.b16 %v1339, %v1333
    %v1784 = vpack.c.b16 %v1340, %v1334
    %v1785 = vpack.c.b16 %v1347, %v1341
    %v1786 = vpack.c.b16 %v1348, %v1342
    %v1787 = vpack.c.b16 %v1349, %v1343
    %v1788 = vpack.c.b16 %v1350, %v1344
    %v1789 = vpack.c.b16 %v1351, %v1345
    %v1790 = vpack.c.b16 %v1352, %v1346
    %v1791 = vpack.c.b16 %v1359, %v1353
    %v1792 = vpack.c.b16 %v1360, %v1354
    %v1793 = vpack.c.b16 %v1361, %v1355
    %v1794 = vpack.c.b16 %v1362, %v1356
    %v1795 = vpack.c.b16 %v1363, %v1357
    %v1796 = vpack.c.b16 %v1364, %v1358
    %v1797 = vpack.c.b16 %v1371, %v1365
    %v1798 = vpack.c.b16 %v1372, %v1366
    %v1799 = vpack.c.b16 %v1373, %v1367
    %v1800 = vpack.c.b16 %v1374, %v1368
    %v1801 = vpack.c.b16 %v1375, %v1369
    %v1802 = vpack.c.b16 %v1376, %v1370
    %v1803 = vpack.c.b16 %v1383, %v1377
    %v1804 = vpack.c.b16 %v1384, %v1378
    %v1805 = vpack.c.b16 %v1385, %v1379
    %v1806 = vpack.c.b16 %v1386, %v1380
    %v1807 = vpack.c.b16 %v1387, %v1381
    %v1808 = vpack.c.b16 %v1388, %v1382
    %v1809 = vpack.c.b16 %v1395, %v1389
    %v1810 = vpack.c.b16 %v1396, %v1390
    %v1811 = vpack.c.b16 %v1397, %v1391
    %v1812 = vpack.c.b16 %v1398, %v1392
    %v1813 = vpack.c.b16 %v1399, %v1393
    %v1814 = vpack.c.b16 %v1400, %v1394
    %v1815 = vpack.c.b16 %v1407, %v1401
    %v1816 = vpack.c.b16 %v1408, %v1402
    %v1817 = vpack.c.b16 %v1409, %v1403
    %v1818 = vpack.c.b16 %v1410, %v1404
    %v1819 = vpack.c.b16 %v1411, %v1405
    %v1820 = vpack.c.b16 %v1412, %v1406
    %v1821 = vpack.c.b16 %v1419, %v1413
    %v1822 = vpack.c.b16 %v1420, %v1414
    %v1823 = vpack.c.b16 %v1421, %v1415
    %v1824 = vpack.c.b16 %v1422, %v1416
    %v1825 = vpack.c.b16 %v1423, %v1417
    %v1826 = vpack.c.b16 %v1424, %v1418
    %v1827 = vpack.c.b16 %v1431, %v1425
    %v1828 = vpack.c.b16 %v1432, %v1426
    %v1829 = vpack.c.b16 %v1433, %v1427
    %v1830 = vpack.c.b16 %v1434, %v1428
    %v1831 = vpack.c.b16 %v1435, %v1429
    %v1832 = vpack.c.b16 %v1436, %v1430
    %v1833 = vpack.c.b16 %v1443, %v1437
    %v1834 = vpack.c.b16 %v1444, %v1438
    %v1835 = vpack.c.b16 %v1445, %v1439
    %v1836 = vpack.c.b16 %v1446, %v1440
    %v1837 = vpack.c.b16 %v1447, %v1441
    %v1838 = vpack.c.b16 %v1448, %v1442
    %v1839 = vpack.c.b16 %v1455, %v1449
    %v1840 = vpack.c.b16 %v1456, %v1450
    %v1841 = vpack.c.b16 %v1457, %v1451
    %v1842 = vpack.c.b16 %v1458, %v1452
    %v1843 = vpack.c.b16 %v1459, %v1453
    %v1844 = vpack.c.b16 %v1460, %v1454
    %v1845 = vpack.c.b16 %v1467, %v1461
    %v1846 = vpack.c.b16 %v1468, %v1462
    %v1847 = vpack.c.b16 %v1469, %v1463
    %v1848 = vpack.c.b16 %v1470, %v1464
    %v1849 = vpack.c.b16 %v1471, %v1465
    %v1850 = vpack.c.b16 %v1472, %v1466
    %v1851 = vpack.c.b16 %v1479, %v1473
    %v1852 = vpack.c.b16 %v1480, %v1474
    %v1853 = vpack.c.b16 %v1481, %v1475
    %v1854 = vpack.c.b16 %v1482, %v1476
    %v1855 = vpack.c.b16 %v1483, %v1477
    %v1856 = vpack.c.b16 %v1484, %v1478
    %v1857 = vpack.c.b16 %v1491, %v1485
    %v1858 = vpack.c.b16 %v1492, %v1486
    %v1859 = vpack.c.b16 %v1493, %v1487
    %v1860 = vpack.c.b16 %v1494, %v1488
    %v1861 = vpack.c.b16 %v1495, %v1489
    %v1862 = vpack.c.b16 %v1496, %v1490
    %v1863 = vpack.c.b16 %v1503, %v1497
    %v1864 = vpack.c.b16 %v1504, %v1498
    %v1865 = vpack.c.b16 %v1505, %v1499
    %v1866 = vpack.c.b16 %v1506, %v1500
    %v1867 = vpack.c.b16 %v1507, %v1501
    %v1868 = vpack.c.b16 %v1508, %v1502
    %v1869 = vpack.c.b16 %v1515, %v1509
    %v1870 = vpack.c.b16 %v1516, %v1510
    %v1871 = vpack.c.b16 %v1517, %v1511
    %v1872 = vpack.c.b16 %v1518, %v1512
    %v1873 = vpack.c.b16 %v1519, %v1513
    %v1874 = vpack.c.b16 %v1520, %v1514
    %v1875 = vpack.c.b16 %v1527, %v1521
    %v1876 = vpack.c.b16 %v1528, %v1522
    %v1877 = vpack.c.b16 %v1529, %v1523
    %v1878 = vpack.c.b16 %v1530, %v1524
    %v1879 = vpack.c.b16 %v1531, %v1525
    %v1880 = vpack.c.b16 %v1532, %v1526
    %v1881 = vpack.c.b16 %v1539, %v1533
    %v1882 = vpack.c.b16 %v1540, %v1534
    %v1883 = vpack.c.b16 %v1541, %v1535
    %v1884 = vpack.c.b16 %v1542, %v1536
    %v1885 = vpack.c.b16 %v1543, %v1537
    %v1886 = vpack.c.b16 %v1544, %v1538
    %v1887 = vpack.c.b16 %v1551, %v1545
    %v1888 = vpack.c.b16 %v1552, %v1546
    %v1889 = vpack.c.b16 %v1553, %v1547
    %v1890 = vpack.c.b16 %v1554, %v1548
    %v1891 = vpack.c.b16 %v1555, %v1549
    %v1892 = vpack.c.b16 %v1556, %v1550
    %v1893 = vpack.c.b16 %v1563, %v1557
    %v1894 = vpack.c.b16 %v1564, %v1558
    %v1895 = vpack.c.b16 %v1565, %v1559
    %v1896 = vpack.c.b16 %v1566, %v1560
    %v1897 = vpack.c.b16 %v1567, %v1561
    %v1898 = vpack.c.b16 %v1568, %v1562
    %v1899 = vpack.c.b16 %v1575, %v1569
    %v1900 = vpack.c.b16 %v1576, %v1570
    %v1901 = vpack.c.b16 %v1577, %v1571
    %v1902 = vpack.c.b16 %v1578, %v1572
    %v1903 = vpack.c.b16 %v1579, %v1573
    %v1904 = vpack.c.b16 %v1580, %v1574
    %v1905 = vpack.c.b16 %v1587, %v1581
    %v1906 = vpack.c.b16 %v1588, %v1582
    %v1907 = vpack.c.b16 %v1589, %v1583
    %v1908 = vpack.c.b16 %v1590, %v1584
    %v1909 = vpack.c.b16 %v1591, %v1585
    %v1910 = vpack.c.b16 %v1592, %v1586
    %v1911 = vpack.c.b16 %v1599, %v1593
    %v1912 = vpack.c.b16 %v1600, %v1594
    %v1913 = vpack.c.b16 %v1601, %v1595
    %v1914 = vpack.c.b16 %v1602, %v1596
    %v1915 = vpack.c.b16 %v1603, %v1597
    %v1916 = vpack.c.b16 %v1604, %v1598
    %v1917 = vpack.c.b16 %v1611, %v1605
    %v1918 = vpack.c.b16 %v1612, %v1606
    %v1919 = vpack.c.b16 %v1613, %v1607
    %v1920 = vpack.c.b16 %v1614, %v1608
    %v1921 = vpack.c.b16 %v1615, %v1609
    %v1922 = vpack.c.b16 %v1616, %v1610
    %v1923 = vpack.c.b16 %v1623, %v1617
    %v1924 = vpack.c.b16 %v1624, %v1618
    %v1925 = vpack.c.b16 %v1625, %v1619
    %v1926 = vpack.c.b16 %v1626, %v1620
    %v1927 = vpack.c.b16 %v1627, %v1621
    %v1928 = vpack.c.b16 %v1628, %v1622
    %v1929 = vpack.c.b16 %v1635, %v1629
    %v1930 = vpack.c.b16 %v1636, %v1630
    %v1931 = vpack.c.b16 %v1637, %v1631
    %v1932 = vpack.c.b16 %v1638, %v1632
    %v1933 = vpack.c.b16 %v1639, %v1633
    %v1934 = vpack.c.b16 %v1640, %v1634
    %v1935 = vpack.c.b16 %v1647, %v1641
    %v1936 = vpack.c.b16 %v1648, %v1642
    %v1937 = vpack.c.b16 %v1649, %v1643
    %v1938 = vpack.c.b16 %v1650, %v1644
    %v1939 = vpack.c.b16 %v1651, %v1645
    %v1940 = vpack.c.b16 %v1652, %v1646
    %2229 = vmatprep.subr.bf16.mxu0 %v1654
    %2230 = vmatpush1.bf16.msra.mxu0 %v1653
    %2231 = vmatprep.subr.bf16.mxu0 %v1660
    %2232 = vmatpush1.bf16.msra.mxu0 %v1659
    %2233 = vmatprep.subr.bf16.mxu0 %v1666
    %2234 = vmatpush1.bf16.msra.mxu0 %v1665
    %2235 = vmatprep.subr.bf16.mxu0 %v1672
    %2236 = vmatpush1.bf16.msra.mxu0 %v1671
    %2237 = vmatprep.subr.bf16.mxu0 %v1678
    %2238 = vmatpush1.bf16.msra.mxu0 %v1677
    %2239 = vmatprep.subr.bf16.mxu0 %v1684
    %2240 = vmatpush1.bf16.msra.mxu0 %v1683
    %2241 = vmatprep.subr.bf16.mxu0 %v1690
    %2242 = vmatpush1.bf16.msra.mxu0 %v1689
    %2243 = vmatprep.subr.bf16.mxu0 %v1696
    %2244 = vmatpush1.bf16.msra.mxu0 %v1695
    %2245 = vmatprep.subr.bf16.mxu0 %v1702
    %2246 = vmatpush1.bf16.msra.mxu0 %v1701
    %2247 = vmatprep.subr.bf16.mxu0 %v1708
    %2248 = vmatpush1.bf16.msra.mxu0 %v1707
    %2249 = vmatprep.subr.bf16.mxu0 %v1714
    %2250 = vmatpush1.bf16.msra.mxu0 %v1713
    %2251 = vmatprep.subr.bf16.mxu0 %v1720
    %2252 = vmatpush1.bf16.msra.mxu0 %v1719
    %2253 = vmatprep.subr.bf16.mxu0 %v1726
    %2254 = vmatpush1.bf16.msra.mxu0 %v1725
    %2255 = vmatprep.subr.bf16.mxu0 %v1732
    %2256 = vmatpush1.bf16.msra.mxu0 %v1731
    %2257 = vmatprep.subr.bf16.mxu0 %v1738
    %2258 = vmatpush1.bf16.msra.mxu0 %v1737
    %2259 = vmatprep.subr.bf16.mxu0 %v1744
    %2260 = vmatpush1.bf16.msra.mxu0 %v1743
    %2261 = vmatprep.mubr.bf16.mxu0 %v464
    %2262 = vmatmul.mubr.bf16.gmra.mrb[0].mxu0 %v463
    %v2263 = vpop.f32.mrb[0].mxu0
    %v2264 = vadd.f32 %v762, %v2263
    %v2265 = vpop.f32.mrb[0].mxu0
    %v2266 = vadd.f32 %v766, %v2265
    %v2267 = vpop.f32.mrb[0].mxu0
    %v2268 = vpop.f32.mrb[0].mxu0
    %2269 = vdwg.mxu0
    %2270 = vmatprep.subr.bf16.mxu0 %v1750
    %2271 = vmatpush1.bf16.msra.mxu0 %v1749
    %2272 = vmatprep.subr.bf16.mxu0 %v1756
    %2273 = vmatpush1.bf16.msra.mxu0 %v1755
    %2274 = vmatprep.subr.bf16.mxu0 %v1762
    %2275 = vmatpush1.bf16.msra.mxu0 %v1761
    %2276 = vmatprep.subr.bf16.mxu0 %v1768
    %2277 = vmatpush1.bf16.msra.mxu0 %v1767
    %2278 = vmatprep.subr.bf16.mxu0 %v1774
    %2279 = vmatpush1.bf16.msra.mxu0 %v1773
    %2280 = vmatprep.subr.bf16.mxu0 %v1780
    %2281 = vmatpush1.bf16.msra.mxu0 %v1779
    %2282 = vmatprep.subr.bf16.mxu0 %v1786
    %2283 = vmatpush1.bf16.msra.mxu0 %v1785
    %2284 = vmatprep.subr.bf16.mxu0 %v1792
    %2285 = vmatpush1.bf16.msra.mxu0 %v1791
    %2286 = vmatprep.subr.bf16.mxu0 %v1798
    %2287 = vmatpush1.bf16.msra.mxu0 %v1797
    %2288 = vmatprep.subr.bf16.mxu0 %v1804
    %2289 = vmatpush1.bf16.msra.mxu0 %v1803
    %2290 = vmatprep.subr.bf16.mxu0 %v1810
    %2291 = vmatpush1.bf16.msra.mxu0 %v1809
    %2292 = vmatprep.subr.bf16.mxu0 %v1816
    %2293 = vmatpush1.bf16.msra.mxu0 %v1815
    %2294 = vmatprep.subr.bf16.mxu0 %v1822
    %2295 = vmatpush1.bf16.msra.mxu0 %v1821
    %2296 = vmatprep.subr.bf16.mxu0 %v1828
    %2297 = vmatpush1.bf16.msra.mxu0 %v1827
    %2298 = vmatprep.subr.bf16.mxu0 %v1834
    %2299 = vmatpush1.bf16.msra.mxu0 %v1833
    %2300 = vmatprep.subr.bf16.mxu0 %v1840
    %2301 = vmatpush1.bf16.msra.mxu0 %v1839
    %2302 = vmatprep.mubr.bf16.mxu0 %v466
    %2303 = vmatmul.mubr.bf16.gmra.mrb[0].mxu0 %v465
    %v2304 = vpop.f32.mrb[0].mxu0
    %v2305 = vadd.f32 %v2264, %v2304
    %v2306 = vpop.f32.mrb[0].mxu0
    %v2307 = vadd.f32 %v2266, %v2306
    %v2308 = vpop.f32.mrb[0].mxu0
    %v2309 = vpop.f32.mrb[0].mxu0
    %2310 = vdwg.mxu0
    %2311 = vmatprep.subr.bf16.mxu0 %v1846
    %2312 = vmatpush1.bf16.msra.mxu0 %v1845
    %2313 = vmatprep.subr.bf16.mxu0 %v1852
    %2314 = vmatpush1.bf16.msra.mxu0 %v1851
    %2315 = vmatprep.subr.bf16.mxu0 %v1858
    %2316 = vmatpush1.bf16.msra.mxu0 %v1857
    %2317 = vmatprep.subr.bf16.mxu0 %v1864
    %2318 = vmatpush1.bf16.msra.mxu0 %v1863
    %2319 = vmatprep.subr.bf16.mxu0 %v1870
    %2320 = vmatpush1.bf16.msra.mxu0 %v1869
    %2321 = vmatprep.subr.bf16.mxu0 %v1876
    %2322 = vmatpush1.bf16.msra.mxu0 %v1875
    %2323 = vmatprep.subr.bf16.mxu0 %v1882
    %2324 = vmatpush1.bf16.msra.mxu0 %v1881
    %2325 = vmatprep.subr.bf16.mxu0 %v1888
    %2326 = vmatpush1.bf16.msra.mxu0 %v1887
    %2327 = vmatprep.subr.bf16.mxu0 %v1894
    %2328 = vmatpush1.bf16.msra.mxu0 %v1893
    %2329 = vmatprep.subr.bf16.mxu0 %v1900
    %2330 = vmatpush1.bf16.msra.mxu0 %v1899
    %2331 = vmatprep.subr.bf16.mxu0 %v1906
    %2332 = vmatpush1.bf16.msra.mxu0 %v1905
    %2333 = vmatprep.subr.bf16.mxu0 %v1912
    %2334 = vmatpush1.bf16.msra.mxu0 %v1911
    %2335 = vmatprep.subr.bf16.mxu0 %v1918
    %2336 = vmatpush1.bf16.msra.mxu0 %v1917
    %2337 = vmatprep.subr.bf16.mxu0 %v1924
    %2338 = vmatpush1.bf16.msra.mxu0 %v1923
    %2339 = vmatprep.subr.bf16.mxu0 %v1930
    %2340 = vmatpush1.bf16.msra.mxu0 %v1929
    %2341 = vmatprep.subr.bf16.mxu0 %v1936
    %2342 = vmatpush1.bf16.msra.mxu0 %v1935
    %2343 = vmatprep.mubr.bf16.mxu0 %v468
    %2344 = vmatmul.mubr.bf16.gmra.mrb[0].mxu0 %v467
    %v2345 = vpop.f32.mrb[0].mxu0
    %v2346 = vadd.f32 %v2305, %v2345
    %v2347 = vpop.f32.mrb[0].mxu0
    %v2348 = vadd.f32 %v2307, %v2347
    %v2349 = vpop.f32.mrb[0].mxu0
    %v2350 = vpop.f32.mrb[0].mxu0
    %2351 = vdwg.mxu0
    %2352 = vmatprep.subr.bf16.mxu0 %v1656
    %2353 = vmatpush1.bf16.msra.mxu0 %v1655
    %2354 = vmatprep.subr.bf16.mxu0 %v1662
    %2355 = vmatpush1.bf16.msra.mxu0 %v1661
    %2356 = vmatprep.subr.bf16.mxu0 %v1668
    %2357 = vmatpush1.bf16.msra.mxu0 %v1667
    %2358 = vmatprep.subr.bf16.mxu0 %v1674
    %2359 = vmatpush1.bf16.msra.mxu0 %v1673
    %2360 = vmatprep.subr.bf16.mxu0 %v1680
    %2361 = vmatpush1.bf16.msra.mxu0 %v1679
    %2362 = vmatprep.subr.bf16.mxu0 %v1686
    %2363 = vmatpush1.bf16.msra.mxu0 %v1685
    %2364 = vmatprep.subr.bf16.mxu0 %v1692
    %2365 = vmatpush1.bf16.msra.mxu0 %v1691
    %2366 = vmatprep.subr.bf16.mxu0 %v1698
    %2367 = vmatpush1.bf16.msra.mxu0 %v1697
    %2368 = vmatprep.subr.bf16.mxu0 %v1704
    %2369 = vmatpush1.bf16.msra.mxu0 %v1703
    %2370 = vmatprep.subr.bf16.mxu0 %v1710
    %2371 = vmatpush1.bf16.msra.mxu0 %v1709
    %2372 = vmatprep.subr.bf16.mxu0 %v1716
    %2373 = vmatpush1.bf16.msra.mxu0 %v1715
    %2374 = vmatprep.subr.bf16.mxu0 %v1722
    %2375 = vmatpush1.bf16.msra.mxu0 %v1721
    %2376 = vmatprep.subr.bf16.mxu0 %v1728
    %2377 = vmatpush1.bf16.msra.mxu0 %v1727
    %2378 = vmatprep.subr.bf16.mxu0 %v1734
    %2379 = vmatpush1.bf16.msra.mxu0 %v1733
    %2380 = vmatprep.subr.bf16.mxu0 %v1740
    %2381 = vmatpush1.bf16.msra.mxu0 %v1739
    %2382 = vmatprep.subr.bf16.mxu0 %v1746
    %2383 = vmatpush1.bf16.msra.mxu0 %v1745
    %2384 = vmatprep.mubr.bf16.mxu0 %v464
    %2385 = vmatmul.mubr.bf16.gmra.mrb[0].mxu0 %v463
    %v2386 = vpop.f32.mrb[0].mxu0
    %v2387 = vadd.f32 %v770, %v2386
    %v2388 = vpop.f32.mrb[0].mxu0
    %v2389 = vadd.f32 %v774, %v2388
    %v2390 = vpop.f32.mrb[0].mxu0
    %v2391 = vpop.f32.mrb[0].mxu0
    %2392 = vdwg.mxu0
    %2393 = vmatprep.subr.bf16.mxu0 %v1752
    %2394 = vmatpush1.bf16.msra.mxu0 %v1751
    %2395 = vmatprep.subr.bf16.mxu0 %v1758
    %2396 = vmatpush1.bf16.msra.mxu0 %v1757
    %2397 = vmatprep.subr.bf16.mxu0 %v1764
    %2398 = vmatpush1.bf16.msra.mxu0 %v1763
    %2399 = vmatprep.subr.bf16.mxu0 %v1770
    %2400 = vmatpush1.bf16.msra.mxu0 %v1769
    %2401 = vmatprep.subr.bf16.mxu0 %v1776
    %2402 = vmatpush1.bf16.msra.mxu0 %v1775
    %2403 = vmatprep.subr.bf16.mxu0 %v1782
    %2404 = vmatpush1.bf16.msra.mxu0 %v1781
    %2405 = vmatprep.subr.bf16.mxu0 %v1788
    %2406 = vmatpush1.bf16.msra.mxu0 %v1787
    %2407 = vmatprep.subr.bf16.mxu0 %v1794
    %2408 = vmatpush1.bf16.msra.mxu0 %v1793
    %2409 = vmatprep.subr.bf16.mxu0 %v1800
    %2410 = vmatpush1.bf16.msra.mxu0 %v1799
    %2411 = vmatprep.subr.bf16.mxu0 %v1806
    %2412 = vmatpush1.bf16.msra.mxu0 %v1805
    %2413 = vmatprep.subr.bf16.mxu0 %v1812
    %2414 = vmatpush1.bf16.msra.mxu0 %v1811
    %2415 = vmatprep.subr.bf16.mxu0 %v1818
    %2416 = vmatpush1.bf16.msra.mxu0 %v1817
    %2417 = vmatprep.subr.bf16.mxu0 %v1824
    %2418 = vmatpush1.bf16.msra.mxu0 %v1823
    %2419 = vmatprep.subr.bf16.mxu0 %v1830
    %2420 = vmatpush1.bf16.msra.mxu0 %v1829
    %2421 = vmatprep.subr.bf16.mxu0 %v1836
    %2422 = vmatpush1.bf16.msra.mxu0 %v1835
    %2423 = vmatprep.subr.bf16.mxu0 %v1842
    %2424 = vmatpush1.bf16.msra.mxu0 %v1841
    %2425 = vmatprep.mubr.bf16.mxu0 %v466
    %2426 = vmatmul.mubr.bf16.gmra.mrb[0].mxu0 %v465
    %v2427 = vpop.f32.mrb[0].mxu0
    %v2428 = vadd.f32 %v2387, %v2427
    %v2429 = vpop.f32.mrb[0].mxu0
    %v2430 = vadd.f32 %v2389, %v2429
    %v2431 = vpop.f32.mrb[0].mxu0
    %v2432 = vpop.f32.mrb[0].mxu0
    %2433 = vdwg.mxu0
    %2434 = vmatprep.subr.bf16.mxu0 %v1848
    %2435 = vmatpush1.bf16.msra.mxu0 %v1847
    %2436 = vmatprep.subr.bf16.mxu0 %v1854
    %2437 = vmatpush1.bf16.msra.mxu0 %v1853
    %2438 = vmatprep.subr.bf16.mxu0 %v1860
    %2439 = vmatpush1.bf16.msra.mxu0 %v1859
    %2440 = vmatprep.subr.bf16.mxu0 %v1866
    %2441 = vmatpush1.bf16.msra.mxu0 %v1865
    %2442 = vmatprep.subr.bf16.mxu0 %v1872
    %2443 = vmatpush1.bf16.msra.mxu0 %v1871
    %2444 = vmatprep.subr.bf16.mxu0 %v1878
    %2445 = vmatpush1.bf16.msra.mxu0 %v1877
    %2446 = vmatprep.subr.bf16.mxu0 %v1884
    %2447 = vmatpush1.bf16.msra.mxu0 %v1883
    %2448 = vmatprep.subr.bf16.mxu0 %v1890
    %2449 = vmatpush1.bf16.msra.mxu0 %v1889
    %2450 = vmatprep.subr.bf16.mxu0 %v1896
    %2451 = vmatpush1.bf16.msra.mxu0 %v1895
    %2452 = vmatprep.subr.bf16.mxu0 %v1902
    %2453 = vmatpush1.bf16.msra.mxu0 %v1901
    %2454 = vmatprep.subr.bf16.mxu0 %v1908
    %2455 = vmatpush1.bf16.msra.mxu0 %v1907
    %2456 = vmatprep.subr.bf16.mxu0 %v1914
    %2457 = vmatpush1.bf16.msra.mxu0 %v1913
    %2458 = vmatprep.subr.bf16.mxu0 %v1920
    %2459 = vmatpush1.bf16.msra.mxu0 %v1919
    %2460 = vmatprep.subr.bf16.mxu0 %v1926
    %2461 = vmatpush1.bf16.msra.mxu0 %v1925
    %2462 = vmatprep.subr.bf16.mxu0 %v1932
    %2463 = vmatpush1.bf16.msra.mxu0 %v1931
    %2464 = vmatprep.subr.bf16.mxu0 %v1938
    %2465 = vmatpush1.bf16.msra.mxu0 %v1937
    %2466 = vmatprep.mubr.bf16.mxu0 %v468
    %2467 = vmatmul.mubr.bf16.gmra.mrb[0].mxu0 %v467
    %v2468 = vpop.f32.mrb[0].mxu0
    %v2469 = vadd.f32 %v2428, %v2468
    %v2470 = vpop.f32.mrb[0].mxu0
    %v2471 = vadd.f32 %v2430, %v2470
    %v2472 = vpop.f32.mrb[0].mxu0
    %v2473 = vpop.f32.mrb[0].mxu0
    %2474 = vdwg.mxu0
    %2475 = vmatprep.subr.bf16.mxu0 %v1658
    %2476 = vmatpush1.bf16.msra.mxu0 %v1657
    %2477 = vmatprep.subr.bf16.mxu0 %v1664
    %2478 = vmatpush1.bf16.msra.mxu0 %v1663
    %2479 = vmatprep.subr.bf16.mxu0 %v1670
    %2480 = vmatpush1.bf16.msra.mxu0 %v1669
    %2481 = vmatprep.subr.bf16.mxu0 %v1676
    %2482 = vmatpush1.bf16.msra.mxu0 %v1675
    %2483 = vmatprep.subr.bf16.mxu0 %v1682
    %2484 = vmatpush1.bf16.msra.mxu0 %v1681
    %2485 = vmatprep.subr.bf16.mxu0 %v1688
    %2486 = vmatpush1.bf16.msra.mxu0 %v1687
    %2487 = vmatprep.subr.bf16.mxu0 %v1694
    %2488 = vmatpush1.bf16.msra.mxu0 %v1693
    %2489 = vmatprep.subr.bf16.mxu0 %v1700
    %2490 = vmatpush1.bf16.msra.mxu0 %v1699
    %2491 = vmatprep.subr.bf16.mxu0 %v1706
    %2492 = vmatpush1.bf16.msra.mxu0 %v1705
    %2493 = vmatprep.subr.bf16.mxu0 %v1712
    %2494 = vmatpush1.bf16.msra.mxu0 %v1711
    %2495 = vmatprep.subr.bf16.mxu0 %v1718
    %2496 = vmatpush1.bf16.msra.mxu0 %v1717
    %2497 = vmatprep.subr.bf16.mxu0 %v1724
    %2498 = vmatpush1.bf16.msra.mxu0 %v1723
    %2499 = vmatprep.subr.bf16.mxu0 %v1730
    %2500 = vmatpush1.bf16.msra.mxu0 %v1729
    %2501 = vmatprep.subr.bf16.mxu0 %v1736
    %2502 = vmatpush1.bf16.msra.mxu0 %v1735
    %2503 = vmatprep.subr.bf16.mxu0 %v1742
    %2504 = vmatpush1.bf16.msra.mxu0 %v1741
    %2505 = vmatprep.subr.bf16.mxu0 %v1748
    %2506 = vmatpush1.bf16.msra.mxu0 %v1747
    %2507 = vmatprep.mubr.bf16.mxu0 %v464
    %2508 = vmatmul.mubr.bf16.gmra.mrb[0].mxu0 %v463
    %v2509 = vpop.f32.mrb[0].mxu0
    %v2510 = vadd.f32 %v778, %v2509
    %v2511 = vpop.f32.mrb[0].mxu0
    %v2512 = vadd.f32 %v782, %v2511
    %v2513 = vpop.f32.mrb[0].mxu0
    %v2514 = vpop.f32.mrb[0].mxu0
    %2515 = vdwg.mxu0
    %2516 = vmatprep.subr.bf16.mxu0 %v1754
    %2517 = vmatpush1.bf16.msra.mxu0 %v1753
    %2518 = vmatprep.subr.bf16.mxu0 %v1760
    %2519 = vmatpush1.bf16.msra.mxu0 %v1759
    %2520 = vmatprep.subr.bf16.mxu0 %v1766
    %2521 = vmatpush1.bf16.msra.mxu0 %v1765
    %2522 = vmatprep.subr.bf16.mxu0 %v1772
    %2523 = vmatpush1.bf16.msra.mxu0 %v1771
    %2524 = vmatprep.subr.bf16.mxu0 %v1778
    %2525 = vmatpush1.bf16.msra.mxu0 %v1777
    %2526 = vmatprep.subr.bf16.mxu0 %v1784
    %2527 = vmatpush1.bf16.msra.mxu0 %v1783
    %2528 = vmatprep.subr.bf16.mxu0 %v1790
    %2529 = vmatpush1.bf16.msra.mxu0 %v1789
    %2530 = vmatprep.subr.bf16.mxu0 %v1796
    %2531 = vmatpush1.bf16.msra.mxu0 %v1795
    %2532 = vmatprep.subr.bf16.mxu0 %v1802
    %2533 = vmatpush1.bf16.msra.mxu0 %v1801
    %2534 = vmatprep.subr.bf16.mxu0 %v1808
    %2535 = vmatpush1.bf16.msra.mxu0 %v1807
    %2536 = vmatprep.subr.bf16.mxu0 %v1814
    %2537 = vmatpush1.bf16.msra.mxu0 %v1813
    %2538 = vmatprep.subr.bf16.mxu0 %v1820
    %2539 = vmatpush1.bf16.msra.mxu0 %v1819
    %2540 = vmatprep.subr.bf16.mxu0 %v1826
    %2541 = vmatpush1.bf16.msra.mxu0 %v1825
    %2542 = vmatprep.subr.bf16.mxu0 %v1832
    %2543 = vmatpush1.bf16.msra.mxu0 %v1831
    %2544 = vmatprep.subr.bf16.mxu0 %v1838
    %2545 = vmatpush1.bf16.msra.mxu0 %v1837
    %2546 = vmatprep.subr.bf16.mxu0 %v1844
    %2547 = vmatpush1.bf16.msra.mxu0 %v1843
    %2548 = vmatprep.mubr.bf16.mxu0 %v466
    %2549 = vmatmul.mubr.bf16.gmra.mrb[0].mxu0 %v465
    %v2550 = vpop.f32.mrb[0].mxu0
    %v2551 = vadd.f32 %v2510, %v2550
    %v2552 = vpop.f32.mrb[0].mxu0
    %v2553 = vadd.f32 %v2512, %v2552
    %v2554 = vpop.f32.mrb[0].mxu0
    %v2555 = vpop.f32.mrb[0].mxu0
    %2556 = vdwg.mxu0
    %2557 = vmatprep.subr.bf16.mxu0 %v1850
    %2558 = vmatpush1.bf16.msra.mxu0 %v1849
    %2559 = vmatprep.subr.bf16.mxu0 %v1856
    %2560 = vmatpush1.bf16.msra.mxu0 %v1855
    %2561 = vmatprep.subr.bf16.mxu0 %v1862
    %2562 = vmatpush1.bf16.msra.mxu0 %v1861
    %2563 = vmatprep.subr.bf16.mxu0 %v1868
    %2564 = vmatpush1.bf16.msra.mxu0 %v1867
    %2565 = vmatprep.subr.bf16.mxu0 %v1874
    %2566 = vmatpush1.bf16.msra.mxu0 %v1873
    %2567 = vmatprep.subr.bf16.mxu0 %v1880
    %2568 = vmatpush1.bf16.msra.mxu0 %v1879
    %2569 = vmatprep.subr.bf16.mxu0 %v1886
    %2570 = vmatpush1.bf16.msra.mxu0 %v1885
    %2571 = vmatprep.subr.bf16.mxu0 %v1892
    %2572 = vmatpush1.bf16.msra.mxu0 %v1891
    %2573 = vmatprep.subr.bf16.mxu0 %v1898
    %2574 = vmatpush1.bf16.msra.mxu0 %v1897
    %2575 = vmatprep.subr.bf16.mxu0 %v1904
    %2576 = vmatpush1.bf16.msra.mxu0 %v1903
    %2577 = vmatprep.subr.bf16.mxu0 %v1910
    %2578 = vmatpush1.bf16.msra.mxu0 %v1909
    %2579 = vmatprep.subr.bf16.mxu0 %v1916
    %2580 = vmatpush1.bf16.msra.mxu0 %v1915
    %2581 = vmatprep.subr.bf16.mxu0 %v1922
    %2582 = vmatpush1.bf16.msra.mxu0 %v1921
    %2583 = vmatprep.subr.bf16.mxu0 %v1928
    %2584 = vmatpush1.bf16.msra.mxu0 %v1927
    %2585 = vmatprep.subr.bf16.mxu0 %v1934
    %2586 = vmatpush1.bf16.msra.mxu0 %v1933
    %2587 = vmatprep.subr.bf16.mxu0 %v1940
    %2588 = vmatpush1.bf16.msra.mxu0 %v1939
    %2589 = vmatprep.mubr.bf16.mxu0 %v468
    %2590 = vmatmul.mubr.bf16.gmra.mrb[0].mxu0 %v467
    %v2591 = vpop.f32.mrb[0].mxu0
    %v2592 = vadd.f32 %v2551, %v2591
    %v2593 = vpop.f32.mrb[0].mxu0
    %v2594 = vadd.f32 %v2553, %v2593
    %v2595 = vpop.f32.mrb[0].mxu0
    %v2596 = vpop.f32.mrb[0].mxu0
    %2597 = vdwg.mxu0
    %v2598 = vmax.f32 %v2346, 0.0
    %v2599 = vmax.f32 %v2348, 0.0
    %v2600 = vmax.f32 %v2469, 0.0
    %v2601 = vmax.f32 %v2471, 0.0
    %v2602 = vmax.f32 %v2592, 0.0
    %v2603 = vmax.f32 %v2594, 0.0
    %v2604 = vld [vmem:[#allocation12] sm:$0x3f]
    %v2606 = vlaneseq
    %v2607 = vshrl.u32 %v2606, 7
    %v2608 = vsub.s32 0, %v2607
    %v2609 = vrot.slane %v2604, %v2608
    %v2610 = vlaneseq
    %v2611 = vshrl.u32 %v2610, 7
    %v2612 = vsub.s32 1, %v2611
    %v2613 = vrot.slane %v2604, %v2612
    %v2614 = vlaneseq
    %v2615 = vshrl.u32 %v2614, 7
    %v2616 = vsub.s32 2, %v2615
    %v2617 = vrot.slane %v2604, %v2616
    %v2618 = vlaneseq
    %v2619 = vshrl.u32 %v2618, 7
    %v2620 = vsub.s32 3, %v2619
    %v2621 = vrot.slane %v2604, %v2620
    %v2622 = vlaneseq
    %v2623 = vshrl.u32 %v2622, 7
    %v2624 = vsub.s32 4, %v2623
    %v2625 = vrot.slane %v2604, %v2624
    %v2626 = vlaneseq
    %v2627 = vshrl.u32 %v2626, 7
    %v2628 = vsub.s32 5, %v2627
    %v2629 = vrot.slane %v2604, %v2628
    %v2636 = vmul.f32 %v2598, %v2609
    %v2637 = vmul.f32 %v2599, %v2613
    %v2638 = vmul.f32 %v2600, %v2617
    %v2639 = vmul.f32 %v2601, %v2621
    %v2640 = vmul.f32 %v2602, %v2625
    %v2641 = vmul.f32 %v2603, %v2629
    %v2642 = vadd.f32 %v2636, %v2637
    %v2643 = vadd.f32 %v2642, %v2638
    %v2644 = vadd.f32 %v2643, %v2639
    %v2645 = vadd.f32 %v2644, %v2640
    %v2646 = vadd.f32 %v2645, %v2641
    %2647 = vadd.xlane.f32.xlu0 %v2646
    %v2648 = vpop.xlane.xlu0 %2647
    %s2649 = sld [smem:[#allocation3]]
    %v2650 = vstv %s2649
    %v2651 = vadd.f32 %v2648, %v2650
    %vm2652 = vcmask 7168
    %2653 = vst.msk [vmem:[%s8] sm:$0xff] %vm2652, %v2651
    // Predicated region
    $region58: #{dueling_q_forward.1} parent=1 // pred_check
      _
    $region59: #{dueling_q_forward.1} parent=1 // pred_check_branch
      %2655 = sbr.rel (0) target = $region61
    $region60: #{dueling_q_forward.1} parent=1 // pred_region
      _
    $region61: #{dueling_q_forward.1} parent=1 // pred_fallthru
      _
    // Predicated region
    $region62: #{dueling_q_forward.1} parent=1 // pred_check
      _
    $region63: #{dueling_q_forward.1} parent=1 // pred_check_branch
      %2657 = sbr.rel (0) target = $region65
    $region64: #{dueling_q_forward.1} parent=1 // pred_region
      _
    $region65: #{dueling_q_forward.1} parent=1 // pred_fallthru
      _
    %2658 = vsyncpa [#allocation5], 1
    %2659 = vsyncpa [#allocation7], 1
    %2660 = vsyncpa [#allocation10], 1
    %2661 = vsyncpa [#allocation13], 1

</llo_original>
